<compile_context>
chip_gen: v5e
topology: v5e:2x2
jax: 0.10.0
libtpu: 0.0.40
codegen_flags: <defaults>
</compile_context>

<pallas_src>
import math
import functools

import jax
import jax.numpy as jnp
from jax.experimental import pallas as pl
from jax.experimental.pallas import tpu as pltpu


# ----------------------------- fused Pallas kernel ---------------------------

def _fused_encoder_kernel(slot_ref, wflag_ref,                 # scalar prefetch (SMEM)
                          h0_ref, mask_ref,                    # (N,E) init hidden, (H*N,H*N) mask
                          g1_ref, be1_ref, wqkv_ref, bqkv_ref,
                          wo_ref, bo_ref, g2_ref, be2_ref,
                          w1_ref, b1_ref, w2t_ref, b2_ref,     # per-layer weights
                          o_ref,                               # output block (1,1,N,E)
                          hid_ref,                             # VMEM scratch (N,E) f32
                          *, num_heads):
    l = pl.program_id(1)
    S, E = hid_ref.shape
    H = num_heads
    dh = E // H

    # grid step (b, 0): seed the resident hidden state with the wrapper-computed
    # patch + position embedding for this batch element.
    @pl.when(l == 0)
    def _():
        hid_ref[...] = h0_ref[...]

    def layernorm(v, g, b):
        # eps=1e-6 matches nn.LayerNorm(embed_dim, eps=1e-06) in the reference.
        mu = jnp.mean(v, axis=-1, keepdims=True)
        d = v - mu
        var = jnp.mean(d * d, axis=-1, keepdims=True)
        return d * jax.lax.rsqrt(var + 1e-6) * g + b

    x = hid_ref[...]                                            # (S, E) f32

    # ---------------- attention branch ----------------
    xn = layernorm(x, g1_ref[...], be1_ref[...])
    # fused QKV matmul; the 1/sqrt(dh) scale is folded into Wq/bq at init time.
    qkv = jnp.dot(xn.astype(jnp.bfloat16), wqkv_ref[...],
                  preferred_element_type=jnp.float32) + bqkv_ref[...]   # (S, 3E)

    # Relayout heads onto sublanes once: (H*S, dh).  One fused score matmul,
    # one softmax and one PV matmul replace H tiny per-head matmuls.
    q_f = jnp.concatenate([qkv[:, h * dh:(h + 1) * dh] for h in range(H)], axis=0)
    k_f = jnp.concatenate([qkv[:, E + h * dh:E + (h + 1) * dh] for h in range(H)], axis=0)
    v_f = jnp.concatenate([qkv[:, 2 * E + h * dh:2 * E + (h + 1) * dh] for h in range(H)], axis=0)

    s = jax.lax.dot_general(q_f.astype(jnp.bfloat16), k_f.astype(jnp.bfloat16),
                            (((1,), (1,)), ((), ())),
                            preferred_element_type=jnp.float32)         # (H*S, H*S)
    s = s + mask_ref[...]                       # hoisted head block-diagonal mask
    m = jnp.max(s, axis=-1, keepdims=True)
    p = jnp.exp(s - m)
    denom = jnp.sum(p, axis=-1, keepdims=True)
    p = p * pl.reciprocal(denom, approx=True)
    ctx_f = jnp.dot(p.astype(jnp.bfloat16), v_f.astype(jnp.bfloat16),
                    preferred_element_type=jnp.float32)                 # (H*S, dh)
    # heads back onto lanes: (S, E)
    ctx = jnp.concatenate([ctx_f[h * S:(h + 1) * S, :] for h in range(H)], axis=1)

    attn_out = jnp.dot(ctx.astype(jnp.bfloat16), wo_ref[...],
                       preferred_element_type=jnp.float32) + bo_ref[...]
    x1 = x + attn_out

    # ---------------- feed-forward branch: FFN(x)=max(0,xW1+b1)W2+b2 ----------
    xn2 = layernorm(x1, g2_ref[...], be2_ref[...])
    h1 = jnp.dot(xn2.astype(jnp.bfloat16), w1_ref[...],
                 preferred_element_type=jnp.float32) + b1_ref[...]      # (S, F)
    h1 = jnp.maximum(h1, 0.0)
    # W2 is stored transposed (E, F) so the streamed block is lane-dense.
    ff = jax.lax.dot_general(h1.astype(jnp.bfloat16), w2t_ref[...],
                             (((1,), (1,)), ((), ())),
                             preferred_element_type=jnp.float32) + b2_ref[...]
    x2 = x1 + ff

    hid_ref[...] = x2

    # Only layers listed in extract_layers write their hidden state to HBM.
    # Invariant (documented, asserted in wrapper): within every run of grid
    # steps sharing the same output slot index, the LAST extract layer of the
    # run has wflag==1, so the block flushed on index change holds valid data.
    @pl.when(wflag_ref[l] == 1)
    def _():
        o_ref[0, 0] = x2


# ----------------------------- glue / wrappers --------------------------------

def extract_patches(x, patch_size):
    """NCDHW -> (B, n_patches, C*p^3), patch-flattening order matches Conv3d."""
    B, C, D, H, W = x.shape
    p = patch_size
    x = x.reshape(B, C, D // p, p, H // p, p, W // p, p)
    x = x.transpose(0, 2, 4, 6, 1, 3, 5, 7)       # (B, d, h, w, C, pi, pj, pk)
    return x.reshape(B, (D // p) * (H // p) * (W // p), C * p * p * p)


def transformer_forward(x, params, patch_size, num_heads, extract_layers):
    """Returns list of hidden states (B, N, E) after each layer in extract_layers."""
    B = x.shape[0]
    patches = extract_patches(x, patch_size)                      # (B, N, P)
    _, N, P = patches.shape
    E = params["wqkv"].shape[1]
    F = params["w1"].shape[2]
    L = params["w1"].shape[0]
    H = num_heads

    # Patch + position embedding as plain XLA (used once; keeps VMEM free for
    # the streamed per-layer weights and shortens the kernel prologue).
    emb = jnp.dot(patches.reshape(B * N, P).astype(jnp.bfloat16), params["patch_w"],
                  preferred_element_type=jnp.float32)
    h0 = (emb.reshape(B, N, E) + params["patch_b"] + params["pos"][None]).astype(jnp.float32)

    # Hoisted attention mask: heads stacked on sublanes -> block-diagonal with
    # blocks of size N (tokens may only attend within their own head).
    r = jnp.arange(H * N)
    mask = jnp.where((r[:, None] // N) == (r[None, :] // N), 0.0, -1e30).astype(jnp.float32)

    # Output slot table: layer l writes into slot "index of next extract layer".
    ext = sorted(set(int(e) for e in extract_layers))
    assert ext and all(1 <= e <= L for e in ext), \
        "extract_layers must be non-empty and in [1, num_layers]"
    n_extract = len(ext)
    slot_map, wflag = [], []
    for l in range(L):
        depth = l + 1
        slot = n_extract - 1
        for j, e in enumerate(ext):
            if e >= depth:
                slot = j
                break
        slot_map.append(slot)
        wflag.append(1 if depth in ext else 0)
    # Slot-scheme invariant check: last layer of every constant-slot run writes.
    for l in range(L):
        if l == L - 1 or slot_map[l + 1] != slot_map[l]:
            last_writer = max(i for i in range(l + 1) if slot_map[i] == slot_map[l] and wflag[i])
            assert slot_map[last_writer] == slot_map[l]
    slot_map = jnp.asarray(slot_map, jnp.int32)
    wflag = jnp.asarray(wflag, jnp.int32)

    def const(shape):
        n = len(shape)
        return pl.BlockSpec(shape, lambda b, l, s, w, _n=n: (0,) * _n)

    def per_layer(shape):
        n = len(shape)
        return pl.BlockSpec((None,) + shape, lambda b, l, s, w, _n=n: (l,) + (0,) * _n)

    kernel = functools.partial(_fused_encoder_kernel, num_heads=num_heads)

    out = pl.pallas_call(
        kernel,
        out_shape=jax.ShapeDtypeStruct((n_extract, B, N, E), jnp.float32),
        grid_spec=pltpu.PrefetchScalarGridSpec(
            num_scalar_prefetch=2,
            grid=(B, L),                                         # (batch, layer)
            in_specs=[
                pl.BlockSpec((None, N, E), lambda b, l, s, w: (b, 0, 0)),  # h0
                const((H * N, H * N)),                           # attention mask
                per_layer((1, E)), per_layer((1, E)),            # ln1 gamma/beta
                per_layer((E, 3 * E)), per_layer((1, 3 * E)),    # Wqkv (Wq pre-scaled), bqkv
                per_layer((E, E)), per_layer((1, E)),            # Wo, bo
                per_layer((1, E)), per_layer((1, E)),            # ln2 gamma/beta
                per_layer((E, F)), per_layer((1, F)),            # W1, b1
                per_layer((E, F)), per_layer((1, E)),            # W2^T (lane-dense), b2
            ],
            out_specs=pl.BlockSpec((1, 1, N, E), lambda b, l, s, w: (s[l], b, 0, 0)),
            scratch_shapes=[pltpu.VMEM((N, E), jnp.float32)],    # resident hidden state
        ),
        compiler_params=pltpu.CompilerParams(
            dimension_semantics=("parallel", "arbitrary")),      # batch feeds v7x's 2nd TC
    )(slot_map, wflag,
      h0, mask,
      params["ln1_g"], params["ln1_b"], params["wqkv"], params["bqkv"],
      params["wo"], params["bo"], params["ln2_g"], params["ln2_b"],
      params["w1"], params["b1"], params["w2t"], params["b2"])

    return [out[i] for i in range(n_extract)]


# ----------------------------- params -----------------------------------------

def init_params(key, input_dim, embed_dim, cube_size, patch_size,
                num_heads, num_layers, d_ff):
    n_patches = (cube_size[0] * cube_size[1] * cube_size[2]) // (patch_size ** 3)
    P = input_dim * patch_size ** 3
    E, F, L = embed_dim, d_ff, num_layers
    dh = E // num_heads
    qscale = 1.0 / math.sqrt(dh)          # attention scale folded into Wq / bq
    keys = jax.random.split(key, 2 + L)

    def rnd(k, shape):
        return jax.random.normal(k, shape, jnp.float32) * 0.02

    params = {
        # Conv3d(kernel=stride=patch) folded into a (P, E) matmul weight (bf16).
        "patch_w": rnd(keys[0], (P, E)).astype(jnp.bfloat16),
        "patch_b": rnd(keys[1], (1, E)),
        # position embeddings initialized to zeros like torch.zeros(1, N, E)
        "pos": jnp.zeros((n_patches, E), jnp.float32),
    }

    lists = {k: [] for k in ("ln1_g", "ln1_b", "wqkv", "bqkv", "wo", "bo",
                             "ln2_g", "ln2_b", "w1", "b1", "w2t", "b2")}
    for l in range(L):
        lk = jax.random.split(keys[2 + l], 12)
        lists["ln1_g"].append(jnp.ones((1, E), jnp.float32))
        lists["ln1_b"].append(jnp.zeros((1, E), jnp.float32))
        wq = rnd(lk[0], (E, E)) * qscale            # one-time parameter prep (free)
        wk, wv = rnd(lk[2], (E, E)), rnd(lk[4], (E, E))
        lists["wqkv"].append(jnp.concatenate([wq, wk, wv], axis=1).astype(jnp.bfloat16))
        bq = rnd(lk[1], (1, E)) * qscale
        bk, bv = rnd(lk[3], (1, E)), rnd(lk[5], (1, E))
        lists["bqkv"].append(jnp.concatenate([bq, bk, bv], axis=1))
        lists["wo"].append(rnd(lk[6], (E, E)).astype(jnp.bfloat16))
        lists["bo"].append(rnd(lk[7], (1, E)))
        lists["ln2_g"].append(jnp.ones((1, E), jnp.float32))
        lists["ln2_b"].append(jnp.zeros((1, E), jnp.float32))
        lists["w1"].append(rnd(lk[8], (E, F)).astype(jnp.bfloat16))
        lists["b1"].append(rnd(lk[9], (1, F)))
        # second FFN Linear stored in (d_model, d_ff) layout (= PyTorch nn.Linear
        # weight layout) so the DMA'd block has a lane-dense d_ff minor dim.
        lists["w2t"].append(rnd(lk[10], (E, F)).astype(jnp.bfloat16))
        lists["b2"].append(rnd(lk[11], (1, E)))

    for k, v in lists.items():
        params[k] = jnp.stack(v)          # leading layer axis (L, ...)
    return params


# ----------------------------- main --------------------------------------------

if __name__ == "__main__":
    # Small config consistent with the module's constructor signature.
    B = 2
    input_dim = 4
    cube_size = (16, 16, 16)
    patch_size = 8
    embed_dim = 32
    num_heads = 4
    num_layers = 4
    d_ff = 2048                       # hardcoded in PositionwiseFeedForward
    extract_layers = [2, 4]

    key = jax.random.PRNGKey(0)
    kx, kp = jax.random.split(key)
    x = jax.random.normal(kx, (B, input_dim) + cube_size, jnp.float32)

    params = init_params(kp, input_dim, embed_dim, cube_size, patch_size,
                         num_heads, num_layers, d_ff)

    fwd = jax.jit(functools.partial(transformer_forward,
                                    patch_size=patch_size,
                                    num_heads=num_heads,
                                    extract_layers=tuple(extract_layers)))
    outs = fwd(x, params)
    outs = jax.block_until_ready(outs)

    n_patches = (cube_size[0] * cube_size[1] * cube_size[2]) // (patch_size ** 3)
    assert len(outs) == len(extract_layers)
    for o in outs:
        assert o.shape == (B, n_patches, embed_dim)
        assert bool(jnp.all(jnp.isfinite(o)))
    print("KERNEL_OK")
</pallas_src>

<mosaic_0001>
module attributes {stable_mosaic.version = 11 : i64} {
  func.func @_fused_encoder_kernel(%arg0: i32, %arg1: i32, %arg2: memref<4xi32, #tpu.memory_space<smem>>, %arg3: memref<4xi32, #tpu.memory_space<smem>>, %arg4: memref<1x8x32xf32, #tpu.memory_space<vmem>>, %arg5: memref<32x32xf32, #tpu.memory_space<vmem>>, %arg6: memref<1x1x32xf32, #tpu.memory_space<vmem>>, %arg7: memref<1x1x32xf32, #tpu.memory_space<vmem>>, %arg8: memref<1x32x96xbf16, #tpu.memory_space<vmem>>, %arg9: memref<1x1x96xf32, #tpu.memory_space<vmem>>, %arg10: memref<1x32x32xbf16, #tpu.memory_space<vmem>>, %arg11: memref<1x1x32xf32, #tpu.memory_space<vmem>>, %arg12: memref<1x1x32xf32, #tpu.memory_space<vmem>>, %arg13: memref<1x1x32xf32, #tpu.memory_space<vmem>>, %arg14: memref<1x32x2048xbf16, #tpu.memory_space<vmem>>, %arg15: memref<1x1x2048xf32, #tpu.memory_space<vmem>>, %arg16: memref<1x32x2048xbf16, #tpu.memory_space<vmem>>, %arg17: memref<1x1x32xf32, #tpu.memory_space<vmem>>, %arg18: memref<1x1x8x32xf32, #tpu.memory_space<vmem>>, %arg19: memref<8x32xf32, #tpu.memory_space<vmem>>) attributes {dimension_semantics = [#tpu.dimension_semantics<parallel>, #tpu.dimension_semantics<arbitrary>], iteration_bounds = array<i64: 2, 4>, scalar_prefetch = 2 : i64, scratch_operands = 1 : i64, tpu.core_type = #tpu.core_type<tc>, window_params = [{transform_indices = @transform_0, window_bounds = array<i64: 1, 8, 32>}, {pipeline_mode = #tpu.pipeline_mode<synchronous>, transform_indices = @transform_1, window_bounds = array<i64: 32, 32>}, {transform_indices = @transform_2, window_bounds = array<i64: 1, 1, 32>}, {transform_indices = @transform_3, window_bounds = array<i64: 1, 1, 32>}, {transform_indices = @transform_4, window_bounds = array<i64: 1, 32, 96>}, {transform_indices = @transform_5, window_bounds = array<i64: 1, 1, 96>}, {transform_indices = @transform_6, window_bounds = array<i64: 1, 32, 32>}, {transform_indices = @transform_7, window_bounds = array<i64: 1, 1, 32>}, {transform_indices = @transform_8, window_bounds = array<i64: 1, 1, 32>}, {transform_indices = @transform_9, window_bounds = array<i64: 1, 1, 32>}, {transform_indices = @transform_10, window_bounds = array<i64: 1, 32, 2048>}, {transform_indices = @transform_11, window_bounds = array<i64: 1, 1, 2048>}, {transform_indices = @transform_12, window_bounds = array<i64: 1, 32, 2048>}, {transform_indices = @transform_13, window_bounds = array<i64: 1, 1, 32>}, {transform_indices = @transform_14, window_bounds = array<i64: 1, 1, 8, 32>}]} {
    %c0_i32 = arith.constant 0 : i32
    %0 = arith.cmpi eq, %arg1, %c0_i32 : i32
    %1 = arith.extui %0 : i1 to i32
    %c0_i32_0 = arith.constant 0 : i32
    %2 = arith.cmpi ne, %1, %c0_i32_0 : i32
    scf.if %2 {
      %c0_61 = arith.constant 0 : index
      %c0_62 = arith.constant 0 : index
      %c0_63 = arith.constant 0 : index
      %132 = vector.load %arg4[%c0_61, %c0_62, %c0_63] : memref<1x8x32xf32, #tpu.memory_space<vmem>>, vector<1x8x32xf32>
      %133 = vector.shape_cast %132 : vector<1x8x32xf32> to vector<8x32xf32>
      %c0_64 = arith.constant 0 : index
      %c0_65 = arith.constant 0 : index
      %134 = vector.load %arg19[%c0_64, %c0_65] : memref<8x32xf32, #tpu.memory_space<vmem>>, vector<8x32xf32>
      tpu.vector_store %arg19[%c0_64, %c0_65], %133 {strides = array<i32>} : memref<8x32xf32, #tpu.memory_space<vmem>>, vector<8x32xf32>,
    } else {
    }
    %c0 = arith.constant 0 : index
    %c0_1 = arith.constant 0 : index
    %3 = vector.load %arg19[%c0, %c0_1] : memref<8x32xf32, #tpu.memory_space<vmem>>, vector<8x32xf32>
    %c0_2 = arith.constant 0 : index
    %c0_3 = arith.constant 0 : index
    %c0_4 = arith.constant 0 : index
    %4 = vector.load %arg6[%c0_2, %c0_3, %c0_4] : memref<1x1x32xf32, #tpu.memory_space<vmem>>, vector<1x1x32xf32>
    %5 = vector.shape_cast %4 : vector<1x1x32xf32> to vector<1x32xf32>
    %c0_5 = arith.constant 0 : index
    %c0_6 = arith.constant 0 : index
    %c0_7 = arith.constant 0 : index
    %6 = vector.load %arg7[%c0_5, %c0_6, %c0_7] : memref<1x1x32xf32, #tpu.memory_space<vmem>>, vector<1x1x32xf32>
    %7 = vector.shape_cast %6 : vector<1x1x32xf32> to vector<1x32xf32>
    %cst = arith.constant dense<0.000000e+00> : vector<8xf32>
    %8 = vector.multi_reduction <add>, %3, %cst [1] : vector<8x32xf32> to vector<8xf32>
    %9 = vector.shape_cast %8 : vector<8xf32> to vector<8x1xf32>
    %cst_8 = arith.constant 3.200000e+01 : f32
    %10 = vector.broadcast %cst_8 : f32 to vector<8x1xf32>
    %11 = arith.divf %9, %10 : vector<8x1xf32>
    %12 = vector.broadcast %11 : vector<8x1xf32> to vector<8x32xf32>
    %13 = arith.subf %3, %12 : vector<8x32xf32>
    %14 = arith.mulf %13, %13 : vector<8x32xf32>
    %cst_9 = arith.constant dense<0.000000e+00> : vector<8xf32>
    %15 = vector.multi_reduction <add>, %14, %cst_9 [1] : vector<8x32xf32> to vector<8xf32>
    %16 = vector.shape_cast %15 : vector<8xf32> to vector<8x1xf32>
    %cst_10 = arith.constant 3.200000e+01 : f32
    %17 = vector.broadcast %cst_10 : f32 to vector<8x1xf32>
    %18 = arith.divf %16, %17 : vector<8x1xf32>
    %cst_11 = arith.constant 9.99999997E-7 : f32
    %19 = vector.broadcast %cst_11 : f32 to vector<8x1xf32>
    %20 = arith.addf %18, %19 : vector<8x1xf32>
    %21 = math.rsqrt %20 : vector<8x1xf32>
    %22 = vector.broadcast %21 : vector<8x1xf32> to vector<8x32xf32>
    %23 = arith.mulf %13, %22 : vector<8x32xf32>
    %24 = vector.broadcast %5 : vector<1x32xf32> to vector<8x32xf32>
    %25 = arith.mulf %23, %24 : vector<8x32xf32>
    %26 = vector.broadcast %7 : vector<1x32xf32> to vector<8x32xf32>
    %27 = arith.addf %25, %26 : vector<8x32xf32>
    %28 = arith.truncf %27 : vector<8x32xf32> to vector<8x32xbf16>
    %c0_12 = arith.constant 0 : index
    %c0_13 = arith.constant 0 : index
    %c0_14 = arith.constant 0 : index
    %29 = vector.load %arg8[%c0_12, %c0_13, %c0_14] : memref<1x32x96xbf16, #tpu.memory_space<vmem>>, vector<1x32x96xbf16>
    %30 = vector.shape_cast %29 : vector<1x32x96xbf16> to vector<32x96xbf16>
    %cst_15 = arith.constant dense<0.000000e+00> : vector<8x96xf32>
    %31 = tpu.matmul %28, %30, %cst_15 {dimension_numbers = #tpu.dot_dimension_numbers<[1], [0], [0], [1], [0, 0, 1, 1], [], []>} : vector<8x32xbf16>, vector<32x96xbf16>, vector<8x96xf32> -> vector<8x96xf32>
    %c0_16 = arith.constant 0 : index
    %c0_17 = arith.constant 0 : index
    %c0_18 = arith.constant 0 : index
    %32 = vector.load %arg9[%c0_16, %c0_17, %c0_18] : memref<1x1x96xf32, #tpu.memory_space<vmem>>, vector<1x1x96xf32>
    %33 = vector.shape_cast %32 : vector<1x1x96xf32> to vector<1x96xf32>
    %34 = vector.broadcast %33 : vector<1x96xf32> to vector<8x96xf32>
    %35 = arith.addf %31, %34 : vector<8x96xf32>
    %36 = vector.extract_strided_slice %35 {offsets = [0, 0], sizes = [8, 8], strides = [1, 1]} : vector<8x96xf32> to vector<8x8xf32>
    %37 = vector.extract_strided_slice %35 {offsets = [0, 8], sizes = [8, 8], strides = [1, 1]} : vector<8x96xf32> to vector<8x8xf32>
    %38 = vector.extract_strided_slice %35 {offsets = [0, 16], sizes = [8, 8], strides = [1, 1]} : vector<8x96xf32> to vector<8x8xf32>
    %39 = vector.extract_strided_slice %35 {offsets = [0, 24], sizes = [8, 8], strides = [1, 1]} : vector<8x96xf32> to vector<8x8xf32>
    %40 = tpu.concatenate %36, %37, %38, %39 in 0 : vector<8x8xf32>, vector<8x8xf32>, vector<8x8xf32>, vector<8x8xf32> -> vector<32x8xf32>
    %41 = vector.extract_strided_slice %35 {offsets = [0, 32], sizes = [8, 8], strides = [1, 1]} : vector<8x96xf32> to vector<8x8xf32>
    %42 = vector.extract_strided_slice %35 {offsets = [0, 40], sizes = [8, 8], strides = [1, 1]} : vector<8x96xf32> to vector<8x8xf32>
    %43 = vector.extract_strided_slice %35 {offsets = [0, 48], sizes = [8, 8], strides = [1, 1]} : vector<8x96xf32> to vector<8x8xf32>
    %44 = vector.extract_strided_slice %35 {offsets = [0, 56], sizes = [8, 8], strides = [1, 1]} : vector<8x96xf32> to vector<8x8xf32>
    %45 = tpu.concatenate %41, %42, %43, %44 in 0 : vector<8x8xf32>, vector<8x8xf32>, vector<8x8xf32>, vector<8x8xf32> -> vector<32x8xf32>
    %46 = vector.extract_strided_slice %35 {offsets = [0, 64], sizes = [8, 8], strides = [1, 1]} : vector<8x96xf32> to vector<8x8xf32>
    %47 = vector.extract_strided_slice %35 {offsets = [0, 72], sizes = [8, 8], strides = [1, 1]} : vector<8x96xf32> to vector<8x8xf32>
    %48 = vector.extract_strided_slice %35 {offsets = [0, 80], sizes = [8, 8], strides = [1, 1]} : vector<8x96xf32> to vector<8x8xf32>
    %49 = vector.extract_strided_slice %35 {offsets = [0, 88], sizes = [8, 8], strides = [1, 1]} : vector<8x96xf32> to vector<8x8xf32>
    %50 = tpu.concatenate %46, %47, %48, %49 in 0 : vector<8x8xf32>, vector<8x8xf32>, vector<8x8xf32>, vector<8x8xf32> -> vector<32x8xf32>
    %51 = arith.truncf %40 : vector<32x8xf32> to vector<32x8xbf16>
    %52 = arith.truncf %45 : vector<32x8xf32> to vector<32x8xbf16>
    %cst_19 = arith.constant dense<0.000000e+00> : vector<32x32xf32>
    %53 = tpu.matmul %51, %52, %cst_19 {dimension_numbers = #tpu.dot_dimension_numbers<[1], [1], [0], [0], [0, 0, 1, 0], [], []>} : vector<32x8xbf16>, vector<32x8xbf16>, vector<32x32xf32> -> vector<32x32xf32>
    %c0_20 = arith.constant 0 : index
    %c0_21 = arith.constant 0 : index
    %54 = vector.load %arg5[%c0_20, %c0_21] : memref<32x32xf32, #tpu.memory_space<vmem>>, vector<32x32xf32>
    %55 = arith.addf %53, %54 : vector<32x32xf32>
    %cst_22 = arith.constant dense<0xFF800000> : vector<32xf32>
    %56 = vector.multi_reduction <maximumf>, %55, %cst_22 [1] : vector<32x32xf32> to vector<32xf32>
    %57 = vector.shape_cast %56 : vector<32xf32> to vector<32x1xf32>
    %58 = vector.broadcast %57 : vector<32x1xf32> to vector<32x32xf32>
    %59 = arith.subf %55, %58 : vector<32x32xf32>
    %60 = math.exp %59 : vector<32x32xf32>
    %cst_23 = arith.constant dense<0.000000e+00> : vector<32xf32>
    %61 = vector.multi_reduction <add>, %60, %cst_23 [1] : vector<32x32xf32> to vector<32xf32>
    %62 = vector.shape_cast %61 : vector<32xf32> to vector<32x1xf32>
    %63 = tpu.reciprocal %62 {approx = true} : vector<32x1xf32> -> vector<32x1xf32>
    %64 = vector.broadcast %63 : vector<32x1xf32> to vector<32x32xf32>
    %65 = arith.mulf %60, %64 : vector<32x32xf32>
    %66 = arith.truncf %65 : vector<32x32xf32> to vector<32x32xbf16>
    %67 = arith.truncf %50 : vector<32x8xf32> to vector<32x8xbf16>
    %cst_24 = arith.constant dense<0.000000e+00> : vector<32x8xf32>
    %68 = tpu.matmul %66, %67, %cst_24 {dimension_numbers = #tpu.dot_dimension_numbers<[1], [0], [0], [1], [0, 0, 1, 1], [], []>} : vector<32x32xbf16>, vector<32x8xbf16>, vector<32x8xf32> -> vector<32x8xf32>
    %69 = vector.extract_strided_slice %68 {offsets = [0, 0], sizes = [8, 8], strides = [1, 1]} : vector<32x8xf32> to vector<8x8xf32>
    %70 = vector.extract_strided_slice %68 {offsets = [8, 0], sizes = [8, 8], strides = [1, 1]} : vector<32x8xf32> to vector<8x8xf32>
    %71 = vector.extract_strided_slice %68 {offsets = [16, 0], sizes = [8, 8], strides = [1, 1]} : vector<32x8xf32> to vector<8x8xf32>
    %72 = vector.extract_strided_slice %68 {offsets = [24, 0], sizes = [8, 8], strides = [1, 1]} : vector<32x8xf32> to vector<8x8xf32>
    %73 = tpu.concatenate %69, %70, %71, %72 in 1 : vector<8x8xf32>, vector<8x8xf32>, vector<8x8xf32>, vector<8x8xf32> -> vector<8x32xf32>
    %74 = arith.truncf %73 : vector<8x32xf32> to vector<8x32xbf16>
    %c0_25 = arith.constant 0 : index
    %c0_26 = arith.constant 0 : index
    %c0_27 = arith.constant 0 : index
    %75 = vector.load %arg10[%c0_25, %c0_26, %c0_27] : memref<1x32x32xbf16, #tpu.memory_space<vmem>>, vector<1x32x32xbf16>
    %76 = vector.shape_cast %75 : vector<1x32x32xbf16> to vector<32x32xbf16>
    %cst_28 = arith.constant dense<0.000000e+00> : vector<8x32xf32>
    %77 = tpu.matmul %74, %76, %cst_28 {dimension_numbers = #tpu.dot_dimension_numbers<[1], [0], [0], [1], [0, 0, 1, 1], [], []>} : vector<8x32xbf16>, vector<32x32xbf16>, vector<8x32xf32> -> vector<8x32xf32>
    %c0_29 = arith.constant 0 : index
    %c0_30 = arith.constant 0 : index
    %c0_31 = arith.constant 0 : index
    %78 = vector.load %arg11[%c0_29, %c0_30, %c0_31] : memref<1x1x32xf32, #tpu.memory_space<vmem>>, vector<1x1x32xf32>
    %79 = vector.shape_cast %78 : vector<1x1x32xf32> to vector<1x32xf32>
    %80 = vector.broadcast %79 : vector<1x32xf32> to vector<8x32xf32>
    %81 = arith.addf %77, %80 : vector<8x32xf32>
    %82 = arith.addf %3, %81 : vector<8x32xf32>
    %c0_32 = arith.constant 0 : index
    %c0_33 = arith.constant 0 : index
    %c0_34 = arith.constant 0 : index
    %83 = vector.load %arg12[%c0_32, %c0_33, %c0_34] : memref<1x1x32xf32, #tpu.memory_space<vmem>>, vector<1x1x32xf32>
    %84 = vector.shape_cast %83 : vector<1x1x32xf32> to vector<1x32xf32>
    %c0_35 = arith.constant 0 : index
    %c0_36 = arith.constant 0 : index
    %c0_37 = arith.constant 0 : index
    %85 = vector.load %arg13[%c0_35, %c0_36, %c0_37] : memref<1x1x32xf32, #tpu.memory_space<vmem>>, vector<1x1x32xf32>
    %86 = vector.shape_cast %85 : vector<1x1x32xf32> to vector<1x32xf32>
    %cst_38 = arith.constant dense<0.000000e+00> : vector<8xf32>
    %87 = vector.multi_reduction <add>, %82, %cst_38 [1] : vector<8x32xf32> to vector<8xf32>
    %88 = vector.shape_cast %87 : vector<8xf32> to vector<8x1xf32>
    %cst_39 = arith.constant 3.200000e+01 : f32
    %89 = vector.broadcast %cst_39 : f32 to vector<8x1xf32>
    %90 = arith.divf %88, %89 : vector<8x1xf32>
    %91 = vector.broadcast %90 : vector<8x1xf32> to vector<8x32xf32>
    %92 = arith.subf %82, %91 : vector<8x32xf32>
    %93 = arith.mulf %92, %92 : vector<8x32xf32>
    %cst_40 = arith.constant dense<0.000000e+00> : vector<8xf32>
    %94 = vector.multi_reduction <add>, %93, %cst_40 [1] : vector<8x32xf32> to vector<8xf32>
    %95 = vector.shape_cast %94 : vector<8xf32> to vector<8x1xf32>
    %cst_41 = arith.constant 3.200000e+01 : f32
    %96 = vector.broadcast %cst_41 : f32 to vector<8x1xf32>
    %97 = arith.divf %95, %96 : vector<8x1xf32>
    %cst_42 = arith.constant 9.99999997E-7 : f32
    %98 = vector.broadcast %cst_42 : f32 to vector<8x1xf32>
    %99 = arith.addf %97, %98 : vector<8x1xf32>
    %100 = math.rsqrt %99 : vector<8x1xf32>
    %101 = vector.broadcast %100 : vector<8x1xf32> to vector<8x32xf32>
    %102 = arith.mulf %92, %101 : vector<8x32xf32>
    %103 = vector.broadcast %84 : vector<1x32xf32> to vector<8x32xf32>
    %104 = arith.mulf %102, %103 : vector<8x32xf32>
    %105 = vector.broadcast %86 : vector<1x32xf32> to vector<8x32xf32>
    %106 = arith.addf %104, %105 : vector<8x32xf32>
    %107 = arith.truncf %106 : vector<8x32xf32> to vector<8x32xbf16>
    %c0_43 = arith.constant 0 : index
    %c0_44 = arith.constant 0 : index
    %c0_45 = arith.constant 0 : index
    %108 = vector.load %arg14[%c0_43, %c0_44, %c0_45] : memref<1x32x2048xbf16, #tpu.memory_space<vmem>>, vector<1x32x2048xbf16>
    %109 = vector.shape_cast %108 : vector<1x32x2048xbf16> to vector<32x2048xbf16>
    %cst_46 = arith.constant dense<0.000000e+00> : vector<8x2048xf32>
    %110 = tpu.matmul %107, %109, %cst_46 {dimension_numbers = #tpu.dot_dimension_numbers<[1], [0], [0], [1], [0, 0, 1, 1], [], []>} : vector<8x32xbf16>, vector<32x2048xbf16>, vector<8x2048xf32> -> vector<8x2048xf32>
    %c0_47 = arith.constant 0 : index
    %c0_48 = arith.constant 0 : index
    %c0_49 = arith.constant 0 : index
    %111 = vector.load %arg15[%c0_47, %c0_48, %c0_49] : memref<1x1x2048xf32, #tpu.memory_space<vmem>>, vector<1x1x2048xf32>
    %112 = vector.shape_cast %111 : vector<1x1x2048xf32> to vector<1x2048xf32>
    %113 = vector.broadcast %112 : vector<1x2048xf32> to vector<8x2048xf32>
    %114 = arith.addf %110, %113 : vector<8x2048xf32>
    %cst_50 = arith.constant 0.000000e+00 : f32
    %115 = vector.broadcast %cst_50 : f32 to vector<8x2048xf32>
    %116 = arith.maximumf %114, %115 : vector<8x2048xf32>
    %117 = arith.truncf %116 : vector<8x2048xf32> to vector<8x2048xbf16>
    %c0_51 = arith.constant 0 : index
    %c0_52 = arith.constant 0 : index
    %c0_53 = arith.constant 0 : index
    %118 = vector.load %arg16[%c0_51, %c0_52, %c0_53] : memref<1x32x2048xbf16, #tpu.memory_space<vmem>>, vector<1x32x2048xbf16>
    %119 = vector.shape_cast %118 : vector<1x32x2048xbf16> to vector<32x2048xbf16>
    %cst_54 = arith.constant dense<0.000000e+00> : vector<8x32xf32>
    %120 = tpu.matmul %117, %119, %cst_54 {dimension_numbers = #tpu.dot_dimension_numbers<[1], [1], [0], [0], [0, 0, 1, 0], [], []>} : vector<8x2048xbf16>, vector<32x2048xbf16>, vector<8x32xf32> -> vector<8x32xf32>
    %c0_55 = arith.constant 0 : index
    %c0_56 = arith.constant 0 : index
    %c0_57 = arith.constant 0 : index
    %121 = vector.load %arg17[%c0_55, %c0_56, %c0_57] : memref<1x1x32xf32, #tpu.memory_space<vmem>>, vector<1x1x32xf32>
    %122 = vector.shape_cast %121 : vector<1x1x32xf32> to vector<1x32xf32>
    %123 = vector.broadcast %122 : vector<1x32xf32> to vector<8x32xf32>
    %124 = arith.addf %120, %123 : vector<8x32xf32>
    %125 = arith.addf %82, %124 : vector<8x32xf32>
    %c0_58 = arith.constant 0 : index
    %c0_59 = arith.constant 0 : index
    %126 = vector.load %arg19[%c0_58, %c0_59] : memref<8x32xf32, #tpu.memory_space<vmem>>, vector<8x32xf32>
    tpu.vector_store %arg19[%c0_58, %c0_59], %125 {strides = array<i32>} : memref<8x32xf32, #tpu.memory_space<vmem>>, vector<8x32xf32>,
    %127 = arith.index_cast %arg1 : i32 to index
    %128 = memref.load %arg3[%127] : memref<4xi32, #tpu.memory_space<smem>>
    %c1_i32 = arith.constant 1 : i32
    %129 = arith.cmpi eq, %128, %c1_i32 : i32
    %130 = arith.extui %129 : i1 to i32
    %c0_i32_60 = arith.constant 0 : i32
    %131 = arith.cmpi ne, %130, %c0_i32_60 : i32
    scf.if %131 {
      %c0_61 = arith.constant 0 : index
      %c0_62 = arith.constant 0 : index
      %c0_63 = arith.constant 0 : index
      %c0_64 = arith.constant 0 : index
      %132 = vector.load %arg18[%c0_61, %c0_62, %c0_63, %c0_64] : memref<1x1x8x32xf32, #tpu.memory_space<vmem>>, vector<1x1x8x32xf32>
      %133 = vector.shape_cast %132 : vector<1x1x8x32xf32> to vector<8x32xf32>
      %134 = vector.shape_cast %125 : vector<8x32xf32> to vector<1x1x8x32xf32>
      tpu.vector_store %arg18[%c0_61, %c0_62, %c0_63, %c0_64], %134 {strides = array<i32>} : memref<1x1x8x32xf32, #tpu.memory_space<vmem>>, vector<1x1x8x32xf32>,
    } else {
    }
    return
  }
  func.func @transform_0(%arg0: i32, %arg1: i32, %arg2: memref<4xi32, #tpu.memory_space<smem>>, %arg3: memref<4xi32, #tpu.memory_space<smem>>) -> (i32, i32, i32) {
    %c0_i32 = arith.constant 0 : i32
    %c0_i32_0 = arith.constant 0 : i32
    %c0_i32_1 = arith.constant 0 : i32
    return %arg0, %c0_i32, %c0_i32_0 : i32, i32, i32
  }
  func.func @transform_1(%arg0: i32, %arg1: i32, %arg2: memref<4xi32, #tpu.memory_space<smem>>, %arg3: memref<4xi32, #tpu.memory_space<smem>>) -> (i32, i32) {
    %c0_i32 = arith.constant 0 : i32
    %c0_i32_0 = arith.constant 0 : i32
    %c0_i32_1 = arith.constant 0 : i32
    return %c0_i32, %c0_i32_0 : i32, i32
  }
  func.func @transform_2(%arg0: i32, %arg1: i32, %arg2: memref<4xi32, #tpu.memory_space<smem>>, %arg3: memref<4xi32, #tpu.memory_space<smem>>) -> (i32, i32, i32) {
    %c0_i32 = arith.constant 0 : i32
    %c0_i32_0 = arith.constant 0 : i32
    %c0_i32_1 = arith.constant 0 : i32
    return %arg1, %c0_i32, %c0_i32_0 : i32, i32, i32
  }
  func.func @transform_3(%arg0: i32, %arg1: i32, %arg2: memref<4xi32, #tpu.memory_space<smem>>, %arg3: memref<4xi32, #tpu.memory_space<smem>>) -> (i32, i32, i32) {
    %c0_i32 = arith.constant 0 : i32
    %c0_i32_0 = arith.constant 0 : i32
    %c0_i32_1 = arith.constant 0 : i32
    return %arg1, %c0_i32, %c0_i32_0 : i32, i32, i32
  }
  func.func @transform_4(%arg0: i32, %arg1: i32, %arg2: memref<4xi32, #tpu.memory_space<smem>>, %arg3: memref<4xi32, #tpu.memory_space<smem>>) -> (i32, i32, i32) {
    %c0_i32 = arith.constant 0 : i32
    %c0_i32_0 = arith.constant 0 : i32
    %c0_i32_1 = arith.constant 0 : i32
    return %arg1, %c0_i32, %c0_i32_0 : i32, i32, i32
  }
  func.func @transform_5(%arg0: i32, %arg1: i32, %arg2: memref<4xi32, #tpu.memory_space<smem>>, %arg3: memref<4xi32, #tpu.memory_space<smem>>) -> (i32, i32, i32) {
    %c0_i32 = arith.constant 0 : i32
    %c0_i32_0 = arith.constant 0 : i32
    %c0_i32_1 = arith.constant 0 : i32
    return %arg1, %c0_i32, %c0_i32_0 : i32, i32, i32
  }
  func.func @transform_6(%arg0: i32, %arg1: i32, %arg2: memref<4xi32, #tpu.memory_space<smem>>, %arg3: memref<4xi32, #tpu.memory_space<smem>>) -> (i32, i32, i32) {
    %c0_i32 = arith.constant 0 : i32
    %c0_i32_0 = arith.constant 0 : i32
    %c0_i32_1 = arith.constant 0 : i32
    return %arg1, %c0_i32, %c0_i32_0 : i32, i32, i32
  }
  func.func @transform_7(%arg0: i32, %arg1: i32, %arg2: memref<4xi32, #tpu.memory_space<smem>>, %arg3: memref<4xi32, #tpu.memory_space<smem>>) -> (i32, i32, i32) {
    %c0_i32 = arith.constant 0 : i32
    %c0_i32_0 = arith.constant 0 : i32
    %c0_i32_1 = arith.constant 0 : i32
    return %arg1, %c0_i32, %c0_i32_0 : i32, i32, i32
  }
  func.func @transform_8(%arg0: i32, %arg1: i32, %arg2: memref<4xi32, #tpu.memory_space<smem>>, %arg3: memref<4xi32, #tpu.memory_space<smem>>) -> (i32, i32, i32) {
    %c0_i32 = arith.constant 0 : i32
    %c0_i32_0 = arith.constant 0 : i32
    %c0_i32_1 = arith.constant 0 : i32
    return %arg1, %c0_i32, %c0_i32_0 : i32, i32, i32
  }
  func.func @transform_9(%arg0: i32, %arg1: i32, %arg2: memref<4xi32, #tpu.memory_space<smem>>, %arg3: memref<4xi32, #tpu.memory_space<smem>>) -> (i32, i32, i32) {
    %c0_i32 = arith.constant 0 : i32
    %c0_i32_0 = arith.constant 0 : i32
    %c0_i32_1 = arith.constant 0 : i32
    return %arg1, %c0_i32, %c0_i32_0 : i32, i32, i32
  }
  func.func @transform_10(%arg0: i32, %arg1: i32, %arg2: memref<4xi32, #tpu.memory_space<smem>>, %arg3: memref<4xi32, #tpu.memory_space<smem>>) -> (i32, i32, i32) {
    %c0_i32 = arith.constant 0 : i32
    %c0_i32_0 = arith.constant 0 : i32
    %c0_i32_1 = arith.constant 0 : i32
    return %arg1, %c0_i32, %c0_i32_0 : i32, i32, i32
  }
  func.func @transform_11(%arg0: i32, %arg1: i32, %arg2: memref<4xi32, #tpu.memory_space<smem>>, %arg3: memref<4xi32, #tpu.memory_space<smem>>) -> (i32, i32, i32) {
    %c0_i32 = arith.constant 0 : i32
    %c0_i32_0 = arith.constant 0 : i32
    %c0_i32_1 = arith.constant 0 : i32
    return %arg1, %c0_i32, %c0_i32_0 : i32, i32, i32
  }
  func.func @transform_12(%arg0: i32, %arg1: i32, %arg2: memref<4xi32, #tpu.memory_space<smem>>, %arg3: memref<4xi32, #tpu.memory_space<smem>>) -> (i32, i32, i32) {
    %c0_i32 = arith.constant 0 : i32
    %c0_i32_0 = arith.constant 0 : i32
    %c0_i32_1 = arith.constant 0 : i32
    return %arg1, %c0_i32, %c0_i32_0 : i32, i32, i32
  }
  func.func @transform_13(%arg0: i32, %arg1: i32, %arg2: memref<4xi32, #tpu.memory_space<smem>>, %arg3: memref<4xi32, #tpu.memory_space<smem>>) -> (i32, i32, i32) {
    %c0_i32 = arith.constant 0 : i32
    %c0_i32_0 = arith.constant 0 : i32
    %c0_i32_1 = arith.constant 0 : i32
    return %arg1, %c0_i32, %c0_i32_0 : i32, i32, i32
  }
  func.func @transform_14(%arg0: i32, %arg1: i32, %arg2: memref<4xi32, #tpu.memory_space<smem>>, %arg3: memref<4xi32, #tpu.memory_space<smem>>) -> (i32, i32, i32, i32) {
    %0 = arith.index_cast %arg1 : i32 to index
    %1 = memref.load %arg2[%0] : memref<4xi32, #tpu.memory_space<smem>>
    %c0_i32 = arith.constant 0 : i32
    %c0_i32_0 = arith.constant 0 : i32
    %c0_i32_1 = arith.constant 0 : i32
    return %1, %arg0, %c0_i32, %c0_i32_0 : i32, i32, i32, i32
  }
}

</mosaic_0001>

<llo_original>
// kernel: transformer_forward.1
$region0: #{transformer_forward.1}
  #allocation0 [shape = 'u32[]', space=smem, size = 0x4, offset = 0x4, fixed_abs, tag = 'smem constant byte address 0x4 - core index']
  #allocation1 [shape = 'u32[72,128]{1,0:T(1,128)}', space=vmem, size = 0x9000, scoped, tag = 'internal scratch']
  #allocation2 [shape = 'f32[8,32]{1,0:T(8,128)}', space=vmem, size = 0x1000, scoped, tag = 'scratch operand']
  #allocation3 [shape = 's32[1]{0}', space=sflag, size = 0x4, scoped, tag = 'scoped memory for transformer_forward.1']
  #allocation4 [shape = 'u8[512]{0}', space=smem, size = 0x200, scoped, tag = 'prefetched SMEM operand 0']
  #allocation5 [shape = 'u8[512]{0}', space=smem, size = 0x200, scoped, tag = 'prefetched SMEM operand 1']
  %s0 = inlined_call_operand.vmem [shape: s32[4], index: 0, kind: input, shape index: {}]
  %s1 = inlined_call_operand.vmem [shape: s32[4], index: 1, kind: input, shape index: {}]
  %s2 = inlined_call_operand.vmem [shape: f32[2,8,32], index: 2, kind: input, shape index: {}]
  %s3 = inlined_call_operand.vmem [shape: f32[32,32], index: 3, kind: input, shape index: {}]
  %s4 = inlined_call_operand.vmem [shape: f32[4,1,32], index: 4, kind: input, shape index: {}]
  %s5 = inlined_call_operand.vmem [shape: f32[4,1,32], index: 5, kind: input, shape index: {}]
  %s6 = inlined_call_operand.vmem [shape: bf16[4,32,96], index: 6, kind: input, shape index: {}]
  %s7 = inlined_call_operand.vmem [shape: f32[4,1,96], index: 7, kind: input, shape index: {}]
  %s8 = inlined_call_operand.vmem [shape: bf16[4,32,32], index: 8, kind: input, shape index: {}]
  %s9 = inlined_call_operand.vmem [shape: f32[4,1,32], index: 9, kind: input, shape index: {}]
  %s10 = inlined_call_operand.vmem [shape: f32[4,1,32], index: 10, kind: input, shape index: {}]
  %s11 = inlined_call_operand.vmem [shape: f32[4,1,32], index: 11, kind: input, shape index: {}]
  %s12 = inlined_call_operand.vmem [shape: bf16[4,32,2048], index: 12, kind: input, shape index: {}]
  %s13 = inlined_call_operand.vmem [shape: f32[4,1,2048], index: 13, kind: input, shape index: {}]
  %s14 = inlined_call_operand.vmem [shape: bf16[4,32,2048], index: 14, kind: input, shape index: {}]
  %s15 = inlined_call_operand.vmem [shape: f32[4,1,32], index: 15, kind: input, shape index: {}]
  %s16 = inlined_call_operand.vmem [shape: f32[2,2,8,32], index: 16, kind: output, shape index: {}]
  %s17 = sld [smem:[#allocation0]]
  $region97: #{transformer_forward.1} parent=0
    _
  %s19 = ssub.s32 1, %s17
  %s20 = scalar_select 0, %s19, %s17
  %s22 = sshll.u32 %s0, 4
  %s23 = int_to_ptr.vmem [resolvable:$true] %s22
  %25 = dma.vmem_to_smem %s23, 16, [#allocation4], [#allocation3]
  %s27 = sshll.u32 %s1, 4
  %s28 = int_to_ptr.vmem [resolvable:$true] %s27
  %30 = dma.vmem_to_smem %s28, 16, [#allocation5], [#allocation3]
  %32 = dma.done [#allocation3], 32
  %33 = sfence
  loop: start=0, step=1, limit=10
  $region2: #{transformer_forward.1} parent=0 // loop_pre_header
    _
  $region3: #{transformer_forward.1} parent=0 // loop_header
    %s35 = sphi 0, %s39
    %p36 = scmp.ge.s32.totalorder %s35, 10
    %s42 = sphi 0, %s54
    %s43 = sphi 0, %s50
    %s44 = sphi 0, %s42
    %s45 = sphi 0, %s43
    %s46 = sphi 0, %s44
    %s47 = sphi 0, %s45
    %s57 = sphi 0, %s59
    %s60 = sphi 0, %s57
    %s61 = sphi 0, %s60
    %s77 = sphi 0, %s61
    %s81 = sphi 0, %s81
    %s83 = sphi 0, %s81
    %s84 = sphi 0, %s83
    %s98 = sphi 0, %s84
    %s104 = sphi 0, %s106
    %s107 = sphi 0, %s104
    %s108 = sphi 0, %s107
    %s124 = sphi 0, %s108
    %s130 = sphi 0, %s132
    %s133 = sphi 0, %s130
    %s134 = sphi 0, %s133
    %s150 = sphi 0, %s134
    %s156 = sphi 0, %s158
    %s159 = sphi 0, %s156
    %s160 = sphi 0, %s159
    %s176 = sphi 0, %s160
    %s182 = sphi 0, %s184
    %s185 = sphi 0, %s182
    %s186 = sphi 0, %s185
    %s202 = sphi 0, %s186
    %s208 = sphi 0, %s210
    %s211 = sphi 0, %s208
    %s212 = sphi 0, %s211
    %s228 = sphi 0, %s212
    %s234 = sphi 0, %s236
    %s237 = sphi 0, %s234
    %s238 = sphi 0, %s237
    %s254 = sphi 0, %s238
    %s260 = sphi 0, %s262
    %s263 = sphi 0, %s260
    %s264 = sphi 0, %s263
    %s280 = sphi 0, %s264
    %s286 = sphi 0, %s288
    %s289 = sphi 0, %s286
    %s290 = sphi 0, %s289
    %s306 = sphi 0, %s290
    %s312 = sphi 0, %s314
    %s315 = sphi 0, %s312
    %s316 = sphi 0, %s315
    %s332 = sphi 0, %s316
    %s338 = sphi 0, %s340
    %s341 = sphi 0, %s338
    %s342 = sphi 0, %s341
    %s358 = sphi 0, %s342
    %s364 = sphi 0, %s366
    %s367 = sphi 0, %s364
    %s368 = sphi 0, %s367
    %s384 = sphi 0, %s368
    %s390 = sphi 0, %s392
    %s393 = sphi 0, %s390
    %s394 = sphi 0, %s393
    %s410 = sphi 0, %s394
    %s420 = sphi 0, %s422
    %s423 = sphi 0, %s420
    %s424 = sphi 0, %s423
    %s440 = sphi 0, %s424
  $region4: #{transformer_forward.1} parent=0 // loop_header_branch
    %38 = sbr.rel (%p36) target = $region8
  $region5: #{transformer_forward.1} parent=0 // loop_body
    %s40 = ssub.s32 %s35, 1
    %s41 = ssub.s32 %s35, 2
    %s48 = sadd.s32 1, %s43
    %p49 = scmp.ge.s32.totalorder %s48, 4
    %s50 = scalar_select %p49, 0, %s48
    %s51 = sadd.s32 1, %s42
    %s52 = scalar_select %p49, %s51, %s42
    %p53 = scmp.ge.s32.totalorder %s52, 2
    %s54 = scalar_select %p53, 0, %s52
    %s55 = ssub.s32 %s42, %s54
    %p56 = scmp.eq.s32.totalorder %s55, 0
    %s58 = sadd.s32 %s57, 1
    %s59 = scalar_select %p56, %s57, %s58
    %p62 = pneg %p56
    %p63 = scmp.eq.s32.totalorder %s35, 7
    %p64 = por %p62, %p63
    %p65 = scmp.ne.s32.totalorder %s57, %s60
    %p66 = scmp.eq.s32.totalorder %s35, 0
    %p67 = por %p65, %p66
    %p68 = scmp.ne.s32.totalorder %s57, %s60
    %p69 = scmp.eq.s32.totalorder %s40, 7
    %p70 = por %p68, %p69
    %p71 = scmp.ne.s32.totalorder %s60, %s61
    %p72 = scmp.eq.s32.totalorder %s40, 0
    %p73 = por %p71, %p72
    %p74 = scmp.ne.s32.totalorder %s60, %s61
    %p75 = scmp.eq.s32.totalorder %s41, 7
    %p76 = por %p74, %p75
    %p78 = scmp.ne.s32.totalorder %s61, %s77
    %p79 = scmp.eq.s32.totalorder %s41, 0
    %p80 = por %p78, %p79
    %s82 = sadd.s32 %s81, 1
    %p85 = scmp.eq.s32.totalorder %s35, 7
    %p86 = scmp.ne.s32.totalorder %s81, %s83
    %p87 = scmp.eq.s32.totalorder %s35, 0
    %p88 = por %p86, %p87
    %p89 = scmp.ne.s32.totalorder %s81, %s83
    %p90 = scmp.eq.s32.totalorder %s40, 7
    %p91 = por %p89, %p90
    %p92 = scmp.ne.s32.totalorder %s83, %s84
    %p93 = scmp.eq.s32.totalorder %s40, 0
    %p94 = por %p92, %p93
    %p95 = scmp.ne.s32.totalorder %s83, %s84
    %p96 = scmp.eq.s32.totalorder %s41, 7
    %p97 = por %p95, %p96
    %p99 = scmp.ne.s32.totalorder %s84, %s98
    %p100 = scmp.eq.s32.totalorder %s41, 0
    %p101 = por %p99, %p100
    %s102 = ssub.s32 %s43, %s50
    %p103 = scmp.eq.s32.totalorder %s102, 0
    %s105 = sadd.s32 %s104, 1
    %s106 = scalar_select %p103, %s104, %s105
    %p109 = pneg %p103
    %p110 = scmp.eq.s32.totalorder %s35, 7
    %p111 = por %p109, %p110
    %p112 = scmp.ne.s32.totalorder %s104, %s107
    %p113 = scmp.eq.s32.totalorder %s35, 0
    %p114 = por %p112, %p113
    %p115 = scmp.ne.s32.totalorder %s104, %s107
    %p116 = scmp.eq.s32.totalorder %s40, 7
    %p117 = por %p115, %p116
    %p118 = scmp.ne.s32.totalorder %s107, %s108
    %p119 = scmp.eq.s32.totalorder %s40, 0
    %p120 = por %p118, %p119
    %p121 = scmp.ne.s32.totalorder %s107, %s108
    %p122 = scmp.eq.s32.totalorder %s41, 7
    %p123 = por %p121, %p122
    %p125 = scmp.ne.s32.totalorder %s108, %s124
    %p126 = scmp.eq.s32.totalorder %s41, 0
    %p127 = por %p125, %p126
    %s128 = ssub.s32 %s43, %s50
    %p129 = scmp.eq.s32.totalorder %s128, 0
    %s131 = sadd.s32 %s130, 1
    %s132 = scalar_select %p129, %s130, %s131
    %p135 = pneg %p129
    %p136 = scmp.eq.s32.totalorder %s35, 7
    %p137 = por %p135, %p136
    %p138 = scmp.ne.s32.totalorder %s130, %s133
    %p139 = scmp.eq.s32.totalorder %s35, 0
    %p140 = por %p138, %p139
    %p141 = scmp.ne.s32.totalorder %s130, %s133
    %p142 = scmp.eq.s32.totalorder %s40, 7
    %p143 = por %p141, %p142
    %p144 = scmp.ne.s32.totalorder %s133, %s134
    %p145 = scmp.eq.s32.totalorder %s40, 0
    %p146 = por %p144, %p145
    %p147 = scmp.ne.s32.totalorder %s133, %s134
    %p148 = scmp.eq.s32.totalorder %s41, 7
    %p149 = por %p147, %p148
    %p151 = scmp.ne.s32.totalorder %s134, %s150
    %p152 = scmp.eq.s32.totalorder %s41, 0
    %p153 = por %p151, %p152
    %s154 = ssub.s32 %s43, %s50
    %p155 = scmp.eq.s32.totalorder %s154, 0
    %s157 = sadd.s32 %s156, 1
    %s158 = scalar_select %p155, %s156, %s157
    %p161 = pneg %p155
    %p162 = scmp.eq.s32.totalorder %s35, 7
    %p163 = por %p161, %p162
    %p164 = scmp.ne.s32.totalorder %s156, %s159
    %p165 = scmp.eq.s32.totalorder %s35, 0
    %p166 = por %p164, %p165
    %p167 = scmp.ne.s32.totalorder %s156, %s159
    %p168 = scmp.eq.s32.totalorder %s40, 7
    %p169 = por %p167, %p168
    %p170 = scmp.ne.s32.totalorder %s159, %s160
    %p171 = scmp.eq.s32.totalorder %s40, 0
    %p172 = por %p170, %p171
    %p173 = scmp.ne.s32.totalorder %s159, %s160
    %p174 = scmp.eq.s32.totalorder %s41, 7
    %p175 = por %p173, %p174
    %p177 = scmp.ne.s32.totalorder %s160, %s176
    %p178 = scmp.eq.s32.totalorder %s41, 0
    %p179 = por %p177, %p178
    %s180 = ssub.s32 %s43, %s50
    %p181 = scmp.eq.s32.totalorder %s180, 0
    %s183 = sadd.s32 %s182, 1
    %s184 = scalar_select %p181, %s182, %s183
    %p187 = pneg %p181
    %p188 = scmp.eq.s32.totalorder %s35, 7
    %p189 = por %p187, %p188
    %p190 = scmp.ne.s32.totalorder %s182, %s185
    %p191 = scmp.eq.s32.totalorder %s35, 0
    %p192 = por %p190, %p191
    %p193 = scmp.ne.s32.totalorder %s182, %s185
    %p194 = scmp.eq.s32.totalorder %s40, 7
    %p195 = por %p193, %p194
    %p196 = scmp.ne.s32.totalorder %s185, %s186
    %p197 = scmp.eq.s32.totalorder %s40, 0
    %p198 = por %p196, %p197
    %p199 = scmp.ne.s32.totalorder %s185, %s186
    %p200 = scmp.eq.s32.totalorder %s41, 7
    %p201 = por %p199, %p200
    %p203 = scmp.ne.s32.totalorder %s186, %s202
    %p204 = scmp.eq.s32.totalorder %s41, 0
    %p205 = por %p203, %p204
    %s206 = ssub.s32 %s43, %s50
    %p207 = scmp.eq.s32.totalorder %s206, 0
    %s209 = sadd.s32 %s208, 1
    %s210 = scalar_select %p207, %s208, %s209
    %p213 = pneg %p207
    %p214 = scmp.eq.s32.totalorder %s35, 7
    %p215 = por %p213, %p214
    %p216 = scmp.ne.s32.totalorder %s208, %s211
    %p217 = scmp.eq.s32.totalorder %s35, 0
    %p218 = por %p216, %p217
    %p219 = scmp.ne.s32.totalorder %s208, %s211
    %p220 = scmp.eq.s32.totalorder %s40, 7
    %p221 = por %p219, %p220
    %p222 = scmp.ne.s32.totalorder %s211, %s212
    %p223 = scmp.eq.s32.totalorder %s40, 0
    %p224 = por %p222, %p223
    %p225 = scmp.ne.s32.totalorder %s211, %s212
    %p226 = scmp.eq.s32.totalorder %s41, 7
    %p227 = por %p225, %p226
    %p229 = scmp.ne.s32.totalorder %s212, %s228
    %p230 = scmp.eq.s32.totalorder %s41, 0
    %p231 = por %p229, %p230
    %s232 = ssub.s32 %s43, %s50
    %p233 = scmp.eq.s32.totalorder %s232, 0
    %s235 = sadd.s32 %s234, 1
    %s236 = scalar_select %p233, %s234, %s235
    %p239 = pneg %p233
    %p240 = scmp.eq.s32.totalorder %s35, 7
    %p241 = por %p239, %p240
    %p242 = scmp.ne.s32.totalorder %s234, %s237
    %p243 = scmp.eq.s32.totalorder %s35, 0
    %p244 = por %p242, %p243
    %p245 = scmp.ne.s32.totalorder %s234, %s237
    %p246 = scmp.eq.s32.totalorder %s40, 7
    %p247 = por %p245, %p246
    %p248 = scmp.ne.s32.totalorder %s237, %s238
    %p249 = scmp.eq.s32.totalorder %s40, 0
    %p250 = por %p248, %p249
    %p251 = scmp.ne.s32.totalorder %s237, %s238
    %p252 = scmp.eq.s32.totalorder %s41, 7
    %p253 = por %p251, %p252
    %p255 = scmp.ne.s32.totalorder %s238, %s254
    %p256 = scmp.eq.s32.totalorder %s41, 0
    %p257 = por %p255, %p256
    %s258 = ssub.s32 %s43, %s50
    %p259 = scmp.eq.s32.totalorder %s258, 0
    %s261 = sadd.s32 %s260, 1
    %s262 = scalar_select %p259, %s260, %s261
    %p265 = pneg %p259
    %p266 = scmp.eq.s32.totalorder %s35, 7
    %p267 = por %p265, %p266
    %p268 = scmp.ne.s32.totalorder %s260, %s263
    %p269 = scmp.eq.s32.totalorder %s35, 0
    %p270 = por %p268, %p269
    %p271 = scmp.ne.s32.totalorder %s260, %s263
    %p272 = scmp.eq.s32.totalorder %s40, 7
    %p273 = por %p271, %p272
    %p274 = scmp.ne.s32.totalorder %s263, %s264
    %p275 = scmp.eq.s32.totalorder %s40, 0
    %p276 = por %p274, %p275
    %p277 = scmp.ne.s32.totalorder %s263, %s264
    %p278 = scmp.eq.s32.totalorder %s41, 7
    %p279 = por %p277, %p278
    %p281 = scmp.ne.s32.totalorder %s264, %s280
    %p282 = scmp.eq.s32.totalorder %s41, 0
    %p283 = por %p281, %p282
    %s284 = ssub.s32 %s43, %s50
    %p285 = scmp.eq.s32.totalorder %s284, 0
    %s287 = sadd.s32 %s286, 1
    %s288 = scalar_select %p285, %s286, %s287
    %p291 = pneg %p285
    %p292 = scmp.eq.s32.totalorder %s35, 7
    %p293 = por %p291, %p292
    %p294 = scmp.ne.s32.totalorder %s286, %s289
    %p295 = scmp.eq.s32.totalorder %s35, 0
    %p296 = por %p294, %p295
    %p297 = scmp.ne.s32.totalorder %s286, %s289
    %p298 = scmp.eq.s32.totalorder %s40, 7
    %p299 = por %p297, %p298
    %p300 = scmp.ne.s32.totalorder %s289, %s290
    %p301 = scmp.eq.s32.totalorder %s40, 0
    %p302 = por %p300, %p301
    %p303 = scmp.ne.s32.totalorder %s289, %s290
    %p304 = scmp.eq.s32.totalorder %s41, 7
    %p305 = por %p303, %p304
    %p307 = scmp.ne.s32.totalorder %s290, %s306
    %p308 = scmp.eq.s32.totalorder %s41, 0
    %p309 = por %p307, %p308
    %s310 = ssub.s32 %s43, %s50
    %p311 = scmp.eq.s32.totalorder %s310, 0
    %s313 = sadd.s32 %s312, 1
    %s314 = scalar_select %p311, %s312, %s313
    %p317 = pneg %p311
    %p318 = scmp.eq.s32.totalorder %s35, 7
    %p319 = por %p317, %p318
    %p320 = scmp.ne.s32.totalorder %s312, %s315
    %p321 = scmp.eq.s32.totalorder %s35, 0
    %p322 = por %p320, %p321
    %p323 = scmp.ne.s32.totalorder %s312, %s315
    %p324 = scmp.eq.s32.totalorder %s40, 7
    %p325 = por %p323, %p324
    %p326 = scmp.ne.s32.totalorder %s315, %s316
    %p327 = scmp.eq.s32.totalorder %s40, 0
    %p328 = por %p326, %p327
    %p329 = scmp.ne.s32.totalorder %s315, %s316
    %p330 = scmp.eq.s32.totalorder %s41, 7
    %p331 = por %p329, %p330
    %p333 = scmp.ne.s32.totalorder %s316, %s332
    %p334 = scmp.eq.s32.totalorder %s41, 0
    %p335 = por %p333, %p334
    %s336 = ssub.s32 %s43, %s50
    %p337 = scmp.eq.s32.totalorder %s336, 0
    %s339 = sadd.s32 %s338, 1
    %s340 = scalar_select %p337, %s338, %s339
    %p343 = pneg %p337
    %p344 = scmp.eq.s32.totalorder %s35, 7
    %p345 = por %p343, %p344
    %p346 = scmp.ne.s32.totalorder %s338, %s341
    %p347 = scmp.eq.s32.totalorder %s35, 0
    %p348 = por %p346, %p347
    %p349 = scmp.ne.s32.totalorder %s338, %s341
    %p350 = scmp.eq.s32.totalorder %s40, 7
    %p351 = por %p349, %p350
    %p352 = scmp.ne.s32.totalorder %s341, %s342
    %p353 = scmp.eq.s32.totalorder %s40, 0
    %p354 = por %p352, %p353
    %p355 = scmp.ne.s32.totalorder %s341, %s342
    %p356 = scmp.eq.s32.totalorder %s41, 7
    %p357 = por %p355, %p356
    %p359 = scmp.ne.s32.totalorder %s342, %s358
    %p360 = scmp.eq.s32.totalorder %s41, 0
    %p361 = por %p359, %p360
    %s362 = ssub.s32 %s43, %s50
    %p363 = scmp.eq.s32.totalorder %s362, 0
    %s365 = sadd.s32 %s364, 1
    %s366 = scalar_select %p363, %s364, %s365
    %p369 = pneg %p363
    %p370 = scmp.eq.s32.totalorder %s35, 7
    %p371 = por %p369, %p370
    %p372 = scmp.ne.s32.totalorder %s364, %s367
    %p373 = scmp.eq.s32.totalorder %s35, 0
    %p374 = por %p372, %p373
    %p375 = scmp.ne.s32.totalorder %s364, %s367
    %p376 = scmp.eq.s32.totalorder %s40, 7
    %p377 = por %p375, %p376
    %p378 = scmp.ne.s32.totalorder %s367, %s368
    %p379 = scmp.eq.s32.totalorder %s40, 0
    %p380 = por %p378, %p379
    %p381 = scmp.ne.s32.totalorder %s367, %s368
    %p382 = scmp.eq.s32.totalorder %s41, 7
    %p383 = por %p381, %p382
    %p385 = scmp.ne.s32.totalorder %s368, %s384
    %p386 = scmp.eq.s32.totalorder %s41, 0
    %p387 = por %p385, %p386
    %s388 = ssub.s32 %s43, %s50
    %p389 = scmp.eq.s32.totalorder %s388, 0
    %s391 = sadd.s32 %s390, 1
    %s392 = scalar_select %p389, %s390, %s391
    %p395 = pneg %p389
    %p396 = scmp.eq.s32.totalorder %s35, 7
    %p397 = por %p395, %p396
    %p398 = scmp.ne.s32.totalorder %s390, %s393
    %p399 = scmp.eq.s32.totalorder %s35, 0
    %p400 = por %p398, %p399
    %p401 = scmp.ne.s32.totalorder %s390, %s393
    %p402 = scmp.eq.s32.totalorder %s40, 7
    %p403 = por %p401, %p402
    %p404 = scmp.ne.s32.totalorder %s393, %s394
    %p405 = scmp.eq.s32.totalorder %s40, 0
    %p406 = por %p404, %p405
    %p407 = scmp.ne.s32.totalorder %s393, %s394
    %p408 = scmp.eq.s32.totalorder %s41, 7
    %p409 = por %p407, %p408
    %p411 = scmp.ne.s32.totalorder %s394, %s410
    %p412 = scmp.eq.s32.totalorder %s41, 0
    %p413 = por %p411, %p412
    %s414 = sld [smem:[#allocation4 + %s43]]
    %s415 = sld [smem:[#allocation4 + %s50]]
    %s416 = ssub.s32 %s414, %s415
    %s417 = ssub.s32 %s42, %s54
    %s418 = sor.u32 %s416, %s417
    %p419 = scmp.eq.s32.totalorder %s418, 0
    %s421 = sadd.s32 %s420, 1
    %s422 = scalar_select %p419, %s420, %s421
    %p425 = pneg %p419
    %p426 = scmp.eq.s32.totalorder %s35, 7
    %p427 = por %p425, %p426
    %p428 = scmp.ne.s32.totalorder %s420, %s423
    %p429 = scmp.eq.s32.totalorder %s35, 0
    %p430 = por %p428, %p429
    %p431 = scmp.ne.s32.totalorder %s420, %s423
    %p432 = scmp.eq.s32.totalorder %s40, 7
    %p433 = por %p431, %p432
    %p434 = scmp.ne.s32.totalorder %s423, %s424
    %p435 = scmp.eq.s32.totalorder %s40, 0
    %p436 = por %p434, %p435
    %p437 = scmp.ne.s32.totalorder %s423, %s424
    %p438 = scmp.eq.s32.totalorder %s41, 7
    %p439 = por %p437, %p438
    %p441 = scmp.ne.s32.totalorder %s424, %s440
    %p442 = scmp.eq.s32.totalorder %s41, 0
    %p443 = por %p441, %p442
    %p444 = scmp.le.s32.totalorder 1, %s35
    %p445 = scmp.lt.s32.totalorder %s35, 9
    %p446 = pnand %p444, %p445
    %p447 = pneg %p446
    // Predicated region
    $region9: #{transformer_forward.1} parent=5 // pred_check
      _
    $region10: #{transformer_forward.1} parent=5 // pred_check_branch
      %449 = sbr.rel (%p446) target = $region12
    $region11: #{transformer_forward.1} parent=5 // pred_region
      %s450 = ssub.s32 %s35, 1
      // Predicated region
      $region13: #{transformer_forward.1} parent=11 // pred_check
        %p451 = pneg %p94
      $region14: #{transformer_forward.1} parent=11 // pred_check_branch
        %453 = sbr.rel (%p451) target = $region16
      $region15: #{transformer_forward.1} parent=11 // pred_region
        _
      $region16: #{transformer_forward.1} parent=11 // pred_fallthru
        _
    $region12: #{transformer_forward.1} parent=5 // pred_fallthru
      _
    %p454 = scmp.lt.s32.totalorder %s35, 8
    // Predicated region
    $region17: #{transformer_forward.1} parent=5 // pred_check
      %p455 = pneg %p454
    $region18: #{transformer_forward.1} parent=5 // pred_check_branch
      %457 = sbr.rel (%p455) target = $region20
    $region19: #{transformer_forward.1} parent=5 // pred_region
      // Predicated region
      $region21: #{transformer_forward.1} parent=19 // pred_check
        %p458 = pneg %p67
      $region22: #{transformer_forward.1} parent=19 // pred_check_branch
        %460 = sbr.rel (%p458) target = $region24
      $region23: #{transformer_forward.1} parent=19 // pred_region
        %p461 = scmp.lt.s32.totalorder %s42, 1
        %s462 = scalar_select %p461, %s42, 1
        %s463 = smul.addr %s462, 8
        %s464 = scalar_lea.vmem %s2, %s463
      $region24: #{transformer_forward.1} parent=19 // pred_fallthru
        _
      // Predicated region
      $region25: #{transformer_forward.1} parent=19 // pred_check
        %p465 = pneg %p114
      $region26: #{transformer_forward.1} parent=19 // pred_check_branch
        %467 = sbr.rel (%p465) target = $region28
      $region27: #{transformer_forward.1} parent=19 // pred_region
        %p468 = scmp.lt.s32.totalorder %s43, 3
        %s469 = scalar_select %p468, %s43, 3
        %s470 = scalar_lea.vmem %s4, %s469
      $region28: #{transformer_forward.1} parent=19 // pred_fallthru
        _
      // Predicated region
      $region29: #{transformer_forward.1} parent=19 // pred_check
        %p471 = pneg %p140
      $region30: #{transformer_forward.1} parent=19 // pred_check_branch
        %473 = sbr.rel (%p471) target = $region32
      $region31: #{transformer_forward.1} parent=19 // pred_region
        %p474 = scmp.lt.s32.totalorder %s43, 3
        %s475 = scalar_select %p474, %s43, 3
        %s476 = scalar_lea.vmem %s5, %s475
      $region32: #{transformer_forward.1} parent=19 // pred_fallthru
        _
      // Predicated region
      $region33: #{transformer_forward.1} parent=19 // pred_check
        %p477 = pneg %p166
      $region34: #{transformer_forward.1} parent=19 // pred_check_branch
        %479 = sbr.rel (%p477) target = $region36
      $region35: #{transformer_forward.1} parent=19 // pred_region
        %p480 = scmp.lt.s32.totalorder %s43, 3
        %s481 = scalar_select %p480, %s43, 3
        %s482 = smul.addr %s481, 4
        %s483 = smul.addr %s482, 4
        %s484 = scalar_lea.vmem %s6, %s483
      $region36: #{transformer_forward.1} parent=19 // pred_fallthru
        _
      // Predicated region
      $region37: #{transformer_forward.1} parent=19 // pred_check
        %p485 = pneg %p192
      $region38: #{transformer_forward.1} parent=19 // pred_check_branch
        %487 = sbr.rel (%p485) target = $region40
      $region39: #{transformer_forward.1} parent=19 // pred_region
        %p488 = scmp.lt.s32.totalorder %s43, 3
        %s489 = scalar_select %p488, %s43, 3
        %s490 = scalar_lea.vmem %s7, %s489
      $region40: #{transformer_forward.1} parent=19 // pred_fallthru
        _
      // Predicated region
      $region41: #{transformer_forward.1} parent=19 // pred_check
        %p491 = pneg %p218
      $region42: #{transformer_forward.1} parent=19 // pred_check_branch
        %493 = sbr.rel (%p491) target = $region44
      $region43: #{transformer_forward.1} parent=19 // pred_region
        %p494 = scmp.lt.s32.totalorder %s43, 3
        %s495 = scalar_select %p494, %s43, 3
        %s496 = smul.addr %s495, 4
        %s497 = smul.addr %s496, 4
        %s498 = scalar_lea.vmem %s8, %s497
      $region44: #{transformer_forward.1} parent=19 // pred_fallthru
        _
      // Predicated region
      $region45: #{transformer_forward.1} parent=19 // pred_check
        %p499 = pneg %p244
      $region46: #{transformer_forward.1} parent=19 // pred_check_branch
        %501 = sbr.rel (%p499) target = $region48
      $region47: #{transformer_forward.1} parent=19 // pred_region
        %p502 = scmp.lt.s32.totalorder %s43, 3
        %s503 = scalar_select %p502, %s43, 3
        %s504 = scalar_lea.vmem %s9, %s503
      $region48: #{transformer_forward.1} parent=19 // pred_fallthru
        _
      // Predicated region
      $region49: #{transformer_forward.1} parent=19 // pred_check
        %p505 = pneg %p270
      $region50: #{transformer_forward.1} parent=19 // pred_check_branch
        %507 = sbr.rel (%p505) target = $region52
      $region51: #{transformer_forward.1} parent=19 // pred_region
        %p508 = scmp.lt.s32.totalorder %s43, 3
        %s509 = scalar_select %p508, %s43, 3
        %s510 = scalar_lea.vmem %s10, %s509
      $region52: #{transformer_forward.1} parent=19 // pred_fallthru
        _
      // Predicated region
      $region53: #{transformer_forward.1} parent=19 // pred_check
        %p511 = pneg %p296
      $region54: #{transformer_forward.1} parent=19 // pred_check_branch
        %513 = sbr.rel (%p511) target = $region56
      $region55: #{transformer_forward.1} parent=19 // pred_region
        %p514 = scmp.lt.s32.totalorder %s43, 3
        %s515 = scalar_select %p514, %s43, 3
        %s516 = scalar_lea.vmem %s11, %s515
      $region56: #{transformer_forward.1} parent=19 // pred_fallthru
        _
      // Predicated region
      $region57: #{transformer_forward.1} parent=19 // pred_check
        %p517 = pneg %p322
      $region58: #{transformer_forward.1} parent=19 // pred_check_branch
        %519 = sbr.rel (%p517) target = $region60
      $region59: #{transformer_forward.1} parent=19 // pred_region
        %p520 = scmp.lt.s32.totalorder %s43, 3
        %s521 = scalar_select %p520, %s43, 3
        %s522 = smul.addr %s521, 64
        %s523 = smul.addr %s522, 4
        %s524 = scalar_lea.vmem %s12, %s523
      $region60: #{transformer_forward.1} parent=19 // pred_fallthru
        _
      // Predicated region
      $region61: #{transformer_forward.1} parent=19 // pred_check
        %p525 = pneg %p348
      $region62: #{transformer_forward.1} parent=19 // pred_check_branch
        %527 = sbr.rel (%p525) target = $region64
      $region63: #{transformer_forward.1} parent=19 // pred_region
        %p528 = scmp.lt.s32.totalorder %s43, 3
        %s529 = scalar_select %p528, %s43, 3
        %s530 = smul.addr %s529, 16
        %s531 = scalar_lea.vmem %s13, %s530
      $region64: #{transformer_forward.1} parent=19 // pred_fallthru
        _
      // Predicated region
      $region65: #{transformer_forward.1} parent=19 // pred_check
        %p532 = pneg %p374
      $region66: #{transformer_forward.1} parent=19 // pred_check_branch
        %534 = sbr.rel (%p532) target = $region68
      $region67: #{transformer_forward.1} parent=19 // pred_region
        %p535 = scmp.lt.s32.totalorder %s43, 3
        %s536 = scalar_select %p535, %s43, 3
        %s537 = smul.addr %s536, 64
        %s538 = smul.addr %s537, 4
        %s539 = scalar_lea.vmem %s14, %s538
      $region68: #{transformer_forward.1} parent=19 // pred_fallthru
        _
      // Predicated region
      $region69: #{transformer_forward.1} parent=19 // pred_check
        %p540 = pneg %p400
      $region70: #{transformer_forward.1} parent=19 // pred_check_branch
        %542 = sbr.rel (%p540) target = $region72
      $region71: #{transformer_forward.1} parent=19 // pred_region
        %p543 = scmp.lt.s32.totalorder %s43, 3
        %s544 = scalar_select %p543, %s43, 3
        %s545 = scalar_lea.vmem %s15, %s544
      $region72: #{transformer_forward.1} parent=19 // pred_fallthru
        _
    $region20: #{transformer_forward.1} parent=5 // pred_fallthru
      _
    %p546 = scmp.le.s32.totalorder 1, %s35
    %p547 = scmp.lt.s32.totalorder %s35, 9
    %p548 = pnand %p546, %p547
    %p549 = pneg %p548
    // Predicated region
    $region73: #{transformer_forward.1} parent=5 // pred_check
      _
    $region74: #{transformer_forward.1} parent=5 // pred_check_branch
      %551 = sbr.rel (%p548) target = $region76
    $region75: #{transformer_forward.1} parent=5 // pred_region
      %s552 = ssub.s32 %s35, 1
      %p553 = scmp.lt.s32.totalorder %s44, 1
      %s554 = scalar_select %p553, %s44, 1
      %s555 = smul.addr %s554, 8
      %s556 = scalar_lea.vmem %s2, %s555
      %p557 = pneg %p73
      %p558 = pneg %p70
      %p559 = pneg %p94
      %p560 = pneg %p91
      %p561 = scmp.lt.s32.totalorder %s45, 3
      %s562 = scalar_select %p561, %s45, 3
      %s563 = scalar_lea.vmem %s4, %s562
      %p564 = pneg %p120
      %p565 = pneg %p117
      %p566 = scmp.lt.s32.totalorder %s45, 3
      %s567 = scalar_select %p566, %s45, 3
      %s568 = scalar_lea.vmem %s5, %s567
      %p569 = pneg %p146
      %p570 = pneg %p143
      %p571 = scmp.lt.s32.totalorder %s45, 3
      %s572 = scalar_select %p571, %s45, 3
      %s573 = smul.addr %s572, 4
      %s574 = smul.addr %s573, 4
      %s575 = scalar_lea.vmem %s6, %s574
      %p576 = pneg %p172
      %p577 = pneg %p169
      %p578 = scmp.lt.s32.totalorder %s45, 3
      %s579 = scalar_select %p578, %s45, 3
      %s580 = scalar_lea.vmem %s7, %s579
      %p581 = pneg %p198
      %p582 = pneg %p195
      %p583 = scmp.lt.s32.totalorder %s45, 3
      %s584 = scalar_select %p583, %s45, 3
      %s585 = smul.addr %s584, 4
      %s586 = smul.addr %s585, 4
      %s587 = scalar_lea.vmem %s8, %s586
      %p588 = pneg %p224
      %p589 = pneg %p221
      %p590 = scmp.lt.s32.totalorder %s45, 3
      %s591 = scalar_select %p590, %s45, 3
      %s592 = scalar_lea.vmem %s9, %s591
      %p593 = pneg %p250
      %p594 = pneg %p247
      %p595 = scmp.lt.s32.totalorder %s45, 3
      %s596 = scalar_select %p595, %s45, 3
      %s597 = scalar_lea.vmem %s10, %s596
      %p598 = pneg %p276
      %p599 = pneg %p273
      %p600 = scmp.lt.s32.totalorder %s45, 3
      %s601 = scalar_select %p600, %s45, 3
      %s602 = scalar_lea.vmem %s11, %s601
      %p603 = pneg %p302
      %p604 = pneg %p299
      %p605 = scmp.lt.s32.totalorder %s45, 3
      %s606 = scalar_select %p605, %s45, 3
      %s607 = smul.addr %s606, 64
      %s608 = smul.addr %s607, 4
      %s609 = scalar_lea.vmem %s12, %s608
      %p610 = pneg %p328
      %p611 = pneg %p325
      %p612 = scmp.lt.s32.totalorder %s45, 3
      %s613 = scalar_select %p612, %s45, 3
      %s614 = smul.addr %s613, 16
      %s615 = scalar_lea.vmem %s13, %s614
      %p616 = pneg %p354
      %p617 = pneg %p351
      %p618 = scmp.lt.s32.totalorder %s45, 3
      %s619 = scalar_select %p618, %s45, 3
      %s620 = smul.addr %s619, 64
      %s621 = smul.addr %s620, 4
      %s622 = scalar_lea.vmem %s14, %s621
      %p623 = pneg %p380
      %p624 = pneg %p377
      %p625 = scmp.lt.s32.totalorder %s45, 3
      %s626 = scalar_select %p625, %s45, 3
      %s627 = scalar_lea.vmem %s15, %s626
      %p628 = pneg %p406
      %p629 = pneg %p403
      %p630 = pneg %p436
      %p631 = pneg %p433
      %s632 = sld [smem:[#allocation4 + %s45]]
      %p633 = scmp.lt.s32.totalorder %s632, 1
      %s634 = scalar_select %p633, %s632, 1
      %p635 = scmp.lt.s32.totalorder %s44, 1
      %s636 = scalar_select %p635, %s44, 1
      %s637 = smul.addr %s634, 2
      %s638 = sadd.s32 %s636, %s637
      %s639 = smul.addr %s638, 8
      %s640 = scalar_lea.vmem %s16, %s639
      %p641 = scmp.lt.s32.totalorder %s44, 1
      %s642 = scalar_select %p641, %s44, 1
      %s643 = smul.addr %s642, 8
      %s644 = scalar_lea.vmem %s2, %s643
      %p645 = scmp.lt.s32.totalorder %s45, 3
      %s646 = scalar_select %p645, %s45, 3
      %s647 = scalar_lea.vmem %s4, %s646
      %p648 = scmp.lt.s32.totalorder %s45, 3
      %s649 = scalar_select %p648, %s45, 3
      %s650 = scalar_lea.vmem %s5, %s649
      %p651 = scmp.lt.s32.totalorder %s45, 3
      %s652 = scalar_select %p651, %s45, 3
      %s653 = smul.addr %s652, 4
      %s654 = smul.addr %s653, 4
      %s655 = scalar_lea.vmem %s6, %s654
      %p656 = scmp.lt.s32.totalorder %s45, 3
      %s657 = scalar_select %p656, %s45, 3
      %s658 = scalar_lea.vmem %s7, %s657
      %p659 = scmp.lt.s32.totalorder %s45, 3
      %s660 = scalar_select %p659, %s45, 3
      %s661 = smul.addr %s660, 4
      %s662 = smul.addr %s661, 4
      %s663 = scalar_lea.vmem %s8, %s662
      %p664 = scmp.lt.s32.totalorder %s45, 3
      %s665 = scalar_select %p664, %s45, 3
      %s666 = scalar_lea.vmem %s9, %s665
      %p667 = scmp.lt.s32.totalorder %s45, 3
      %s668 = scalar_select %p667, %s45, 3
      %s669 = scalar_lea.vmem %s10, %s668
      %p670 = scmp.lt.s32.totalorder %s45, 3
      %s671 = scalar_select %p670, %s45, 3
      %s672 = scalar_lea.vmem %s11, %s671
      %p673 = scmp.lt.s32.totalorder %s45, 3
      %s674 = scalar_select %p673, %s45, 3
      %s675 = smul.addr %s674, 64
      %s676 = smul.addr %s675, 4
      %s677 = scalar_lea.vmem %s12, %s676
      %p678 = scmp.lt.s32.totalorder %s45, 3
      %s679 = scalar_select %p678, %s45, 3
      %s680 = smul.addr %s679, 16
      %s681 = scalar_lea.vmem %s13, %s680
      %p682 = scmp.lt.s32.totalorder %s45, 3
      %s683 = scalar_select %p682, %s45, 3
      %s684 = smul.addr %s683, 64
      %s685 = smul.addr %s684, 4
      %s686 = scalar_lea.vmem %s14, %s685
      %p687 = scmp.lt.s32.totalorder %s45, 3
      %s688 = scalar_select %p687, %s45, 3
      %s689 = scalar_lea.vmem %s15, %s688
      %s690 = sld [smem:[#allocation4 + %s45]]
      %p691 = scmp.lt.s32.totalorder %s690, 1
      %s692 = scalar_select %p691, %s690, 1
      %p693 = scmp.lt.s32.totalorder %s44, 1
      %s694 = scalar_select %p693, %s44, 1
      %s695 = smul.addr %s692, 2
      %s696 = sadd.s32 %s694, %s695
      %s697 = smul.addr %s696, 8
      %s698 = scalar_lea.vmem %s16, %s697
      %s699 = sld [smem:[#allocation4 + %s45]]
      %p701 = scmp.eq.s32.totalorder %s45, 0
      // Predicated region
      $region77: #{transformer_forward.1} parent=75 // pred_check
        %p702 = pneg %p701
      $region78: #{transformer_forward.1} parent=75 // pred_check_branch
        %704 = sbr.rel (%p702) target = $region80
      $region79: #{transformer_forward.1} parent=75 // pred_region
        %v705 = vld [vmem:[%s644] sm:$0xff]
        %vm706 = vcmask 261120
        %707 = vst.msk [vmem:[#allocation2] sm:$0xff] %vm706, %v705
      $region80: #{transformer_forward.1} parent=75 // pred_fallthru
        _
      %v708 = vld [vmem:[#allocation2] sm:$0xff]
      %v709 = vld [vmem:[%s647] sm:$0x1]
      %v710 = vld [vmem:[%s650] sm:$0x1]
      %vm711 = vcmask 261120
      %v712 = vsel %vm711, %v708, 0.0
      %713 = vadd.xlane.f32.xlu0 %v712
      %v714 = vpop.xlane.xlu0 %713
      %v715 = vrcp.pop 32.0
      %v716 = vmul.f32 32.0, %v715
      %v717 = vsub.f32 1.0, %v716
      %v718 = vmul.f32 %v715, %v717
      %v719 = vadd.f32 %v715, %v718
      %vm720 = vweird.f32 %v715
      %v721 = vsel %vm720, %v715, %v719
      %v722 = vmul.f32 %v714, %v721
      %v723 = vsub.f32 %v708, %v722
      %v724 = vmul.f32 %v723, %v723
      %v725 = vsel %vm711, %v724, 0.0
      %726 = vadd.xlane.f32.xlu0 %v725
      %v727 = vpop.xlane.xlu0 %726
      %v728 = vmul.f32 %v727, %v721
      %v729 = vadd.f32 %v728, 1e-06
      %v730 = vrsqrt.pop %v729
      %v731 = vmul.f32 %v730, %v729
      %v732 = vmul.f32 %v731, %v730
      %v733 = vmul.f32 0.5, %v732
      %v734 = vsub.f32 1.5, %v733
      %v735 = vmul.f32 %v730, %v734
      %vm736 = vweird.f32 %v729
      %vm737 = vweird.f32 %v730
      %vm738 = vmor %vm736, %vm737
      %v739 = vsel %vm738, %v730, %v735
      %v740 = vmul.f32 %v723, %v739
      %v742 = vperm.slane %v709, 0
      %v744 = vmul.f32 %v740, %v742
      %v746 = vperm.slane %v710, 0
      %v748 = vadd.f32 %v744, %v746
      %v749 = vpack.c.bf16 %v748, %v748
      %v750 = vld [vmem:[%s655] sm:$0xf]
      %v751 = vld [vmem:[%s655 + $0x4] sm:$0xf]
      %v752 = vld [vmem:[%s655 + $0x8] sm:$0xf]
      %v753 = vld [vmem:[%s655 + $0xc] sm:$0xf]
      %v754 = vld [vmem:[%s658] sm:$0x1]
      %v756 = vperm.slane %v754, 0
      %v762 = vunpack.c.l.b16 %v750
      %v763 = vunpack.c.l.b16 %v751
      %v764 = vunpack.c.l.b16 %v752
      %v765 = vunpack.c.l.b16 %v753
      %v766 = vpack.c.b16 %v763, %v762
      %v767 = vpack.c.b16 %v765, %v764
      %v771 = vsel %vm711, %v749, 0
      %773 = vmatpush.bf16.msra.mxu0 0
      %774 = vmatpush.bf16.msra.mxu0 0
      %775 = vmatpush.bf16.msra.mxu0 0
      %776 = vmatpush.bf16.msra.mxu0 0
      %777 = vmatpush.bf16.msra.mxu0 0
      %778 = vmatpush.bf16.msra.mxu0 0
      %779 = vmatpush.bf16.msra.mxu0 %v767
      %780 = vmatpush.bf16.msra.mxu0 %v766
      %781 = vmatmul.bf16.gmra.mxu0 %v771
      %v782 = vpop.f32.mrf.mxu0
      %v783 = vadd.f32 %v756, %v782
      %v784 = vpop.f32.mrf.mxu0
      %785 = vdwg.mxu0
      %787 = vrot.lane.b32.xlu0 %v783, 120
      %v788 = vpop.permute.xlu0 %787
      %790 = vrot.lane.b32.xlu0 %v783, 112
      %v791 = vpop.permute.xlu0 %790
      %793 = vrot.lane.b32.xlu0 %v783, 104
      %v794 = vpop.permute.xlu0 %793
      %v796 = vpack.c.bf16 %v788, %v783
      %v797 = vpack.c.bf16 %v794, %v791
      %v798 = vld [vmem:[%s3] sm:$0xff]
      %v799 = vld [vmem:[%s3 + $0x8] sm:$0xff]
      %v800 = vld [vmem:[%s3 + $0x10] sm:$0xff]
      %v801 = vld [vmem:[%s3 + $0x18] sm:$0xff]
      %804 = vrot.lane.b32.xlu0 %v796, 96
      %v805 = vpop.permute.xlu0 %804
      %806 = vrot.lane.b32.xlu0 %v797, 96
      %v807 = vpop.permute.xlu0 %806
      %vm808 = vcmask 64512
      %v810 = vsel %vm808, %v796, 0
      %v813 = vsel %vm808, %v797, 0
      %v816 = vsel %vm808, %v805, 0
      %v819 = vsel %vm808, %v807, 0
      %821 = vmatpush.bf16.xpose.msra.mxu0 0
      %822 = vmatpush.bf16.xpose.msra.mxu0 0
      %823 = vmatpush.bf16.xpose.msra.mxu0 0
      %824 = vmatpush.bf16.xpose.msra.mxu0 0
      %825 = vmatpush.bf16.xpose.msra.mxu0 0
      %826 = vmatpush.bf16.xpose.msra.mxu0 0
      %827 = vmatpush.bf16.xpose.msra.mxu0 %v819
      %828 = vmatpush.bf16.xpose.msra.mxu0 %v816
      %829 = vmatmul.bf16.gmra.mxu0 %v810
      %v830 = vpop.f32.mrf.mxu0
      %v831 = vadd.f32 %v798, %v830
      %v832 = vpop.f32.mrf.mxu0
      %v833 = vadd.f32 %v799, %v832
      %834 = vmatmul.bf16.gmra.mxu0 %v813
      %v835 = vpop.f32.mrf.mxu0
      %v836 = vadd.f32 %v800, %v835
      %v837 = vpop.f32.mrf.mxu0
      %v838 = vadd.f32 %v801, %v837
      %839 = vdwg.mxu0
      %v840 = vsel %vm711, %v831, -inf
      %841 = vmax.xlane.f32.xlu0 %v840
      %v842 = vpop.xlane.xlu0 %841
      %v843 = vsel %vm711, %v833, -inf
      %844 = vmax.xlane.f32.xlu0 %v843
      %v845 = vpop.xlane.xlu0 %844
      %v846 = vsel %vm711, %v836, -inf
      %847 = vmax.xlane.f32.xlu0 %v846
      %v848 = vpop.xlane.xlu0 %847
      %v849 = vsel %vm711, %v838, -inf
      %850 = vmax.xlane.f32.xlu0 %v849
      %v851 = vpop.xlane.xlu0 %850
      %v852 = vsub.f32 %v831, %v842
      %v853 = vsub.f32 %v833, %v845
      %v854 = vsub.f32 %v836, %v848
      %v855 = vsub.f32 %v838, %v851
      %v856 = vmul.f32 %v852, 1.442695
      %v857 = vpow.pop %v856
      %v858 = vmul.f32 %v853, 1.442695
      %v859 = vpow.pop %v858
      %v860 = vmul.f32 %v854, 1.442695
      %v861 = vpow.pop %v860
      %v862 = vmul.f32 %v855, 1.442695
      %v863 = vpow.pop %v862
      %v864 = vsel %vm711, %v857, 0.0
      %865 = vadd.xlane.f32.xlu0 %v864
      %v866 = vpop.xlane.xlu0 %865
      %v867 = vsel %vm711, %v859, 0.0
      %868 = vadd.xlane.f32.xlu0 %v867
      %v869 = vpop.xlane.xlu0 %868
      %v870 = vsel %vm711, %v861, 0.0
      %871 = vadd.xlane.f32.xlu0 %v870
      %v872 = vpop.xlane.xlu0 %871
      %v873 = vsel %vm711, %v863, 0.0
      %874 = vadd.xlane.f32.xlu0 %v873
      %v875 = vpop.xlane.xlu0 %874
      %v876 = vrcp.pop %v866
      %v877 = vrcp.pop %v869
      %v878 = vrcp.pop %v872
      %v879 = vrcp.pop %v875
      %v880 = vmul.f32 %v857, %v876
      %v881 = vmul.f32 %v859, %v877
      %v882 = vmul.f32 %v861, %v878
      %v883 = vmul.f32 %v863, %v879
      %v884 = vpack.c.bf16 %v881, %v880
      %v885 = vpack.c.bf16 %v883, %v882
      %886 = vrot.lane.b32.xlu0 %v796, 64
      %v887 = vpop.permute.xlu0 %886
      %888 = vrot.lane.b32.xlu0 %v797, 64
      %v889 = vpop.permute.xlu0 %888
      %v893 = vsel %vm711, %v884, 0
      %v896 = vsel %vm711, %v885, 0
      %898 = vmatpush.bf16.msra.mxu0 0
      %899 = vmatpush.bf16.msra.mxu0 0
      %900 = vmatpush.bf16.msra.mxu0 0
      %901 = vmatpush.bf16.msra.mxu0 0
      %902 = vmatpush.bf16.msra.mxu0 0
      %903 = vmatpush.bf16.msra.mxu0 0
      %904 = vmatpush.bf16.msra.mxu0 %v889
      %905 = vmatpush.bf16.msra.mxu0 %v887
      %906 = vmatmul.bf16.gmra.mxu0 %v893
      %v907 = vpop.f32.mrf.mxu0
      %v908 = vadd.f32 0.0, %v907
      %v909 = vpop.f32.mrf.mxu0
      %v910 = vadd.f32 0.0, %v909
      %911 = vmatmul.bf16.gmra.mxu0 %v896
      %v912 = vpop.f32.mrf.mxu0
      %v913 = vadd.f32 0.0, %v912
      %v914 = vpop.f32.mrf.mxu0
      %v915 = vadd.f32 0.0, %v914
      %916 = vdwg.mxu0
      %918 = vrot.lane.b32.xlu0 %v910, 8
      %v919 = vpop.permute.xlu0 %918
      %922 = vrot.lane.b32.xlu0 %v913, 16
      %v923 = vpop.permute.xlu0 %922
      %926 = vrot.lane.b32.xlu0 %v915, 24
      %v927 = vpop.permute.xlu0 %926
      %v929 = vsel %vm808, %v908, %v919
      %vm930 = vcmask 130048
      %v931 = vsel %vm930, %v929, %v923
      %vm932 = vcmask 195584
      %v933 = vsel %vm932, %v931, %v927
      %v934 = vpack.c.bf16 %v933, %v933
      %v935 = vld [vmem:[%s663] sm:$0xf]
      %v936 = vld [vmem:[%s663 + $0x4] sm:$0xf]
      %v937 = vld [vmem:[%s663 + $0x8] sm:$0xf]
      %v938 = vld [vmem:[%s663 + $0xc] sm:$0xf]
      %v939 = vld [vmem:[%s666] sm:$0x1]
      %v941 = vperm.slane %v939, 0
      %v947 = vunpack.c.l.b16 %v935
      %v948 = vunpack.c.l.b16 %v936
      %v949 = vunpack.c.l.b16 %v937
      %v950 = vunpack.c.l.b16 %v938
      %v951 = vpack.c.b16 %v948, %v947
      %v952 = vpack.c.b16 %v950, %v949
      %v956 = vsel %vm711, %v934, 0
      %958 = vmatpush.bf16.msra.mxu0 0
      %959 = vmatpush.bf16.msra.mxu0 0
      %960 = vmatpush.bf16.msra.mxu0 0
      %961 = vmatpush.bf16.msra.mxu0 0
      %962 = vmatpush.bf16.msra.mxu0 0
      %963 = vmatpush.bf16.msra.mxu0 0
      %964 = vmatpush.bf16.msra.mxu0 %v952
      %965 = vmatpush.bf16.msra.mxu0 %v951
      %966 = vmatmul.bf16.gmra.mxu0 %v956
      %v967 = vpop.f32.mrf.mxu0
      %v968 = vadd.f32 %v941, %v967
      %v969 = vpop.f32.mrf.mxu0
      %970 = vdwg.mxu0
      %v971 = vadd.f32 %v708, %v968
      %v972 = vld [vmem:[%s669] sm:$0x1]
      %v973 = vld [vmem:[%s672] sm:$0x1]
      %v974 = vsel %vm711, %v971, 0.0
      %975 = vadd.xlane.f32.xlu0 %v974
      %v976 = vpop.xlane.xlu0 %975
      %v977 = vmul.f32 %v976, %v721
      %v978 = vsub.f32 %v971, %v977
      %v979 = vmul.f32 %v978, %v978
      %v980 = vsel %vm711, %v979, 0.0
      %981 = vadd.xlane.f32.xlu0 %v980
      %v982 = vpop.xlane.xlu0 %981
      %v983 = vmul.f32 %v982, %v721
      %v984 = vadd.f32 %v983, 1e-06
      %v985 = vrsqrt.pop %v984
      %v986 = vmul.f32 %v985, %v984
      %v987 = vmul.f32 %v986, %v985
      %v988 = vmul.f32 0.5, %v987
      %v989 = vsub.f32 1.5, %v988
      %v990 = vmul.f32 %v985, %v989
      %vm991 = vweird.f32 %v984
      %vm992 = vweird.f32 %v985
      %vm993 = vmor %vm991, %vm992
      %v994 = vsel %vm993, %v985, %v990
      %v995 = vmul.f32 %v978, %v994
      %v997 = vperm.slane %v972, 0
      %v999 = vmul.f32 %v995, %v997
      %v1001 = vperm.slane %v973, 0
      %v1003 = vadd.f32 %v999, %v1001
      %v1004 = vpack.c.bf16 %v1003, %v1003
      %v1005 = vld [vmem:[%s677] sm:$0xff]
      %v1006 = vld [vmem:[%s677 + $0x8] sm:$0xff]
      %v1007 = vld [vmem:[%s677 + $0x10] sm:$0xff]
      %v1008 = vld [vmem:[%s677 + $0x18] sm:$0xff]
      %v1009 = vld [vmem:[%s677 + $0x20] sm:$0xff]
      %v1010 = vld [vmem:[%s677 + $0x28] sm:$0xff]
      %v1011 = vld [vmem:[%s677 + $0x30] sm:$0xff]
      %v1012 = vld [vmem:[%s677 + $0x38] sm:$0xff]
      %v1013 = vld [vmem:[%s677 + $0x40] sm:$0xff]
      %v1014 = vld [vmem:[%s677 + $0x48] sm:$0xff]
      %v1015 = vld [vmem:[%s677 + $0x50] sm:$0xff]
      %v1016 = vld [vmem:[%s677 + $0x58] sm:$0xff]
      %v1017 = vld [vmem:[%s677 + $0x60] sm:$0xff]
      %v1018 = vld [vmem:[%s677 + $0x68] sm:$0xff]
      %v1019 = vld [vmem:[%s677 + $0x70] sm:$0xff]
      %v1020 = vld [vmem:[%s677 + $0x78] sm:$0xff]
      %v1021 = vld [vmem:[%s677 + $0x80] sm:$0xff]
      %v1022 = vld [vmem:[%s677 + $0x88] sm:$0xff]
      %v1023 = vld [vmem:[%s677 + $0x90] sm:$0xff]
      %v1024 = vld [vmem:[%s677 + $0x98] sm:$0xff]
      %v1025 = vld [vmem:[%s677 + $0xa0] sm:$0xff]
      %v1026 = vld [vmem:[%s677 + $0xa8] sm:$0xff]
      %v1027 = vld [vmem:[%s677 + $0xb0] sm:$0xff]
      %v1028 = vld [vmem:[%s677 + $0xb8] sm:$0xff]
      %v1029 = vld [vmem:[%s677 + $0xc0] sm:$0xff]
      %v1030 = vld [vmem:[%s677 + $0xc8] sm:$0xff]
      %v1031 = vld [vmem:[%s677 + $0xd0] sm:$0xff]
      %v1032 = vld [vmem:[%s677 + $0xd8] sm:$0xff]
      %v1033 = vld [vmem:[%s677 + $0xe0] sm:$0xff]
      %v1034 = vld [vmem:[%s677 + $0xe8] sm:$0xff]
      %v1035 = vld [vmem:[%s677 + $0xf0] sm:$0xff]
      %v1036 = vld [vmem:[%s677 + $0xf8] sm:$0xff]
      %v1037 = vld [vmem:[%s681] sm:$0xff]
      %v1038 = vld [vmem:[%s681 + $0x8] sm:$0xff]
      %v1041 = vperm.slane %v1037, 0
      %v1042 = vperm.slane %v1037, 1
      %v1043 = vperm.slane %v1037, 2
      %v1044 = vperm.slane %v1037, 3
      %v1045 = vperm.slane %v1037, 4
      %v1046 = vperm.slane %v1037, 5
      %v1047 = vperm.slane %v1037, 6
      %v1048 = vperm.slane %v1037, 7
      %v1049 = vperm.slane %v1038, 0
      %v1050 = vperm.slane %v1038, 1
      %v1051 = vperm.slane %v1038, 2
      %v1052 = vperm.slane %v1038, 3
      %v1053 = vperm.slane %v1038, 4
      %v1054 = vperm.slane %v1038, 5
      %v1055 = vperm.slane %v1038, 6
      %v1056 = vperm.slane %v1038, 7
      %v1105 = vunpack.c.l.b16 %v1005
      %v1106 = vunpack.c.h.b16 %v1005
      %v1107 = vunpack.c.l.b16 %v1006
      %v1108 = vunpack.c.h.b16 %v1006
      %v1109 = vunpack.c.l.b16 %v1007
      %v1110 = vunpack.c.h.b16 %v1007
      %v1111 = vunpack.c.l.b16 %v1008
      %v1112 = vunpack.c.h.b16 %v1008
      %v1113 = vunpack.c.l.b16 %v1009
      %v1114 = vunpack.c.h.b16 %v1009
      %v1115 = vunpack.c.l.b16 %v1010
      %v1116 = vunpack.c.h.b16 %v1010
      %v1117 = vunpack.c.l.b16 %v1011
      %v1118 = vunpack.c.h.b16 %v1011
      %v1119 = vunpack.c.l.b16 %v1012
      %v1120 = vunpack.c.h.b16 %v1012
      %v1121 = vunpack.c.l.b16 %v1013
      %v1122 = vunpack.c.h.b16 %v1013
      %v1123 = vunpack.c.l.b16 %v1014
      %v1124 = vunpack.c.h.b16 %v1014
      %v1125 = vunpack.c.l.b16 %v1015
      %v1126 = vunpack.c.h.b16 %v1015
      %v1127 = vunpack.c.l.b16 %v1016
      %v1128 = vunpack.c.h.b16 %v1016
      %v1129 = vunpack.c.l.b16 %v1017
      %v1130 = vunpack.c.h.b16 %v1017
      %v1131 = vunpack.c.l.b16 %v1018
      %v1132 = vunpack.c.h.b16 %v1018
      %v1133 = vunpack.c.l.b16 %v1019
      %v1134 = vunpack.c.h.b16 %v1019
      %v1135 = vunpack.c.l.b16 %v1020
      %v1136 = vunpack.c.h.b16 %v1020
      %v1137 = vunpack.c.l.b16 %v1021
      %v1138 = vunpack.c.h.b16 %v1021
      %v1139 = vunpack.c.l.b16 %v1022
      %v1140 = vunpack.c.h.b16 %v1022
      %v1141 = vunpack.c.l.b16 %v1023
      %v1142 = vunpack.c.h.b16 %v1023
      %v1143 = vunpack.c.l.b16 %v1024
      %v1144 = vunpack.c.h.b16 %v1024
      %v1145 = vunpack.c.l.b16 %v1025
      %v1146 = vunpack.c.h.b16 %v1025
      %v1147 = vunpack.c.l.b16 %v1026
      %v1148 = vunpack.c.h.b16 %v1026
      %v1149 = vunpack.c.l.b16 %v1027
      %v1150 = vunpack.c.h.b16 %v1027
      %v1151 = vunpack.c.l.b16 %v1028
      %v1152 = vunpack.c.h.b16 %v1028
      %v1153 = vunpack.c.l.b16 %v1029
      %v1154 = vunpack.c.h.b16 %v1029
      %v1155 = vunpack.c.l.b16 %v1030
      %v1156 = vunpack.c.h.b16 %v1030
      %v1157 = vunpack.c.l.b16 %v1031
      %v1158 = vunpack.c.h.b16 %v1031
      %v1159 = vunpack.c.l.b16 %v1032
      %v1160 = vunpack.c.h.b16 %v1032
      %v1161 = vunpack.c.l.b16 %v1033
      %v1162 = vunpack.c.h.b16 %v1033
      %v1163 = vunpack.c.l.b16 %v1034
      %v1164 = vunpack.c.h.b16 %v1034
      %v1165 = vunpack.c.l.b16 %v1035
      %v1166 = vunpack.c.h.b16 %v1035
      %v1167 = vunpack.c.l.b16 %v1036
      %v1168 = vunpack.c.h.b16 %v1036
      %v1169 = vpack.c.b16 %v1121, %v1105
      %v1170 = vpack.c.b16 %v1122, %v1106
      %v1171 = vpack.c.b16 %v1123, %v1107
      %v1172 = vpack.c.b16 %v1124, %v1108
      %v1173 = vpack.c.b16 %v1125, %v1109
      %v1174 = vpack.c.b16 %v1126, %v1110
      %v1175 = vpack.c.b16 %v1127, %v1111
      %v1176 = vpack.c.b16 %v1128, %v1112
      %v1177 = vpack.c.b16 %v1129, %v1113
      %v1178 = vpack.c.b16 %v1130, %v1114
      %v1179 = vpack.c.b16 %v1131, %v1115
      %v1180 = vpack.c.b16 %v1132, %v1116
      %v1181 = vpack.c.b16 %v1133, %v1117
      %v1182 = vpack.c.b16 %v1134, %v1118
      %v1183 = vpack.c.b16 %v1135, %v1119
      %v1184 = vpack.c.b16 %v1136, %v1120
      %v1185 = vpack.c.b16 %v1153, %v1137
      %v1186 = vpack.c.b16 %v1154, %v1138
      %v1187 = vpack.c.b16 %v1155, %v1139
      %v1188 = vpack.c.b16 %v1156, %v1140
      %v1189 = vpack.c.b16 %v1157, %v1141
      %v1190 = vpack.c.b16 %v1158, %v1142
      %v1191 = vpack.c.b16 %v1159, %v1143
      %v1192 = vpack.c.b16 %v1160, %v1144
      %v1193 = vpack.c.b16 %v1161, %v1145
      %v1194 = vpack.c.b16 %v1162, %v1146
      %v1195 = vpack.c.b16 %v1163, %v1147
      %v1196 = vpack.c.b16 %v1164, %v1148
      %v1197 = vpack.c.b16 %v1165, %v1149
      %v1198 = vpack.c.b16 %v1166, %v1150
      %v1199 = vpack.c.b16 %v1167, %v1151
      %v1200 = vpack.c.b16 %v1168, %v1152
      %v1234 = vsel %vm711, %v1004, 0
      %1236 = vmatpush.bf16.msra.mxu0 0
      %1237 = vmatpush.bf16.msra.mxu0 0
      %1238 = vmatpush.bf16.msra.mxu0 0
      %1239 = vmatpush.bf16.msra.mxu0 0
      %1240 = vmatpush.bf16.msra.mxu0 0
      %1241 = vmatpush.bf16.msra.mxu0 0
      %1242 = vmatpush.bf16.msra.mxu0 %v1185
      %1243 = vmatpush.bf16.msra.mxu0 %v1169
      %1244 = vmatmul.bf16.gmra.mxu0 %v1234
      %v1245 = vpop.f32.mrf.mxu0
      %v1246 = vadd.f32 %v1041, %v1245
      %v1247 = vpop.f32.mrf.mxu0
      %1248 = vdwg.mxu0
      %1249 = vmatpush.bf16.msra.mxu0 0
      %1250 = vmatpush.bf16.msra.mxu0 0
      %1251 = vmatpush.bf16.msra.mxu0 0
      %1252 = vmatpush.bf16.msra.mxu0 0
      %1253 = vmatpush.bf16.msra.mxu0 0
      %1254 = vmatpush.bf16.msra.mxu0 0
      %1255 = vmatpush.bf16.msra.mxu0 %v1186
      %1256 = vmatpush.bf16.msra.mxu0 %v1170
      %1257 = vmatmul.bf16.gmra.mxu0 %v1234
      %v1258 = vpop.f32.mrf.mxu0
      %v1259 = vadd.f32 %v1042, %v1258
      %v1260 = vpop.f32.mrf.mxu0
      %1261 = vdwg.mxu0
      %1262 = vmatpush.bf16.msra.mxu0 0
      %1263 = vmatpush.bf16.msra.mxu0 0
      %1264 = vmatpush.bf16.msra.mxu0 0
      %1265 = vmatpush.bf16.msra.mxu0 0
      %1266 = vmatpush.bf16.msra.mxu0 0
      %1267 = vmatpush.bf16.msra.mxu0 0
      %1268 = vmatpush.bf16.msra.mxu0 %v1187
      %1269 = vmatpush.bf16.msra.mxu0 %v1171
      %1270 = vmatmul.bf16.gmra.mxu0 %v1234
      %v1271 = vpop.f32.mrf.mxu0
      %v1272 = vadd.f32 %v1043, %v1271
      %v1273 = vpop.f32.mrf.mxu0
      %1274 = vdwg.mxu0
      %1275 = vmatpush.bf16.msra.mxu0 0
      %1276 = vmatpush.bf16.msra.mxu0 0
      %1277 = vmatpush.bf16.msra.mxu0 0
      %1278 = vmatpush.bf16.msra.mxu0 0
      %1279 = vmatpush.bf16.msra.mxu0 0
      %1280 = vmatpush.bf16.msra.mxu0 0
      %1281 = vmatpush.bf16.msra.mxu0 %v1188
      %1282 = vmatpush.bf16.msra.mxu0 %v1172
      %1283 = vmatmul.bf16.gmra.mxu0 %v1234
      %v1284 = vpop.f32.mrf.mxu0
      %v1285 = vadd.f32 %v1044, %v1284
      %v1286 = vpop.f32.mrf.mxu0
      %1287 = vdwg.mxu0
      %1288 = vmatpush.bf16.msra.mxu0 0
      %1289 = vmatpush.bf16.msra.mxu0 0
      %1290 = vmatpush.bf16.msra.mxu0 0
      %1291 = vmatpush.bf16.msra.mxu0 0
      %1292 = vmatpush.bf16.msra.mxu0 0
      %1293 = vmatpush.bf16.msra.mxu0 0
      %1294 = vmatpush.bf16.msra.mxu0 %v1189
      %1295 = vmatpush.bf16.msra.mxu0 %v1173
      %1296 = vmatmul.bf16.gmra.mxu0 %v1234
      %v1297 = vpop.f32.mrf.mxu0
      %v1298 = vadd.f32 %v1045, %v1297
      %v1299 = vpop.f32.mrf.mxu0
      %1300 = vdwg.mxu0
      %1301 = vmatpush.bf16.msra.mxu0 0
      %1302 = vmatpush.bf16.msra.mxu0 0
      %1303 = vmatpush.bf16.msra.mxu0 0
      %1304 = vmatpush.bf16.msra.mxu0 0
      %1305 = vmatpush.bf16.msra.mxu0 0
      %1306 = vmatpush.bf16.msra.mxu0 0
      %1307 = vmatpush.bf16.msra.mxu0 %v1190
      %1308 = vmatpush.bf16.msra.mxu0 %v1174
      %1309 = vmatmul.bf16.gmra.mxu0 %v1234
      %v1310 = vpop.f32.mrf.mxu0
      %v1311 = vadd.f32 %v1046, %v1310
      %v1312 = vpop.f32.mrf.mxu0
      %1313 = vdwg.mxu0
      %1314 = vmatpush.bf16.msra.mxu0 0
      %1315 = vmatpush.bf16.msra.mxu0 0
      %1316 = vmatpush.bf16.msra.mxu0 0
      %1317 = vmatpush.bf16.msra.mxu0 0
      %1318 = vmatpush.bf16.msra.mxu0 0
      %1319 = vmatpush.bf16.msra.mxu0 0
      %1320 = vmatpush.bf16.msra.mxu0 %v1191
      %1321 = vmatpush.bf16.msra.mxu0 %v1175
      %1322 = vmatmul.bf16.gmra.mxu0 %v1234
      %v1323 = vpop.f32.mrf.mxu0
      %v1324 = vadd.f32 %v1047, %v1323
      %v1325 = vpop.f32.mrf.mxu0
      %1326 = vdwg.mxu0
      %1327 = vmatpush.bf16.msra.mxu0 0
      %1328 = vmatpush.bf16.msra.mxu0 0
      %1329 = vmatpush.bf16.msra.mxu0 0
      %1330 = vmatpush.bf16.msra.mxu0 0
      %1331 = vmatpush.bf16.msra.mxu0 0
      %1332 = vmatpush.bf16.msra.mxu0 0
      %1333 = vmatpush.bf16.msra.mxu0 %v1192
      %1334 = vmatpush.bf16.msra.mxu0 %v1176
      %1335 = vmatmul.bf16.gmra.mxu0 %v1234
      %v1336 = vpop.f32.mrf.mxu0
      %v1337 = vadd.f32 %v1048, %v1336
      %v1338 = vpop.f32.mrf.mxu0
      %1339 = vdwg.mxu0
      %1340 = vmatpush.bf16.msra.mxu0 0
      %1341 = vmatpush.bf16.msra.mxu0 0
      %1342 = vmatpush.bf16.msra.mxu0 0
      %1343 = vmatpush.bf16.msra.mxu0 0
      %1344 = vmatpush.bf16.msra.mxu0 0
      %1345 = vmatpush.bf16.msra.mxu0 0
      %1346 = vmatpush.bf16.msra.mxu0 %v1193
      %1347 = vmatpush.bf16.msra.mxu0 %v1177
      %1348 = vmatmul.bf16.gmra.mxu0 %v1234
      %v1349 = vpop.f32.mrf.mxu0
      %v1350 = vadd.f32 %v1049, %v1349
      %v1351 = vpop.f32.mrf.mxu0
      %1352 = vdwg.mxu0
      %1353 = vmatpush.bf16.msra.mxu0 0
      %1354 = vmatpush.bf16.msra.mxu0 0
      %1355 = vmatpush.bf16.msra.mxu0 0
      %1356 = vmatpush.bf16.msra.mxu0 0
      %1357 = vmatpush.bf16.msra.mxu0 0
      %1358 = vmatpush.bf16.msra.mxu0 0
      %1359 = vmatpush.bf16.msra.mxu0 %v1194
      %1360 = vmatpush.bf16.msra.mxu0 %v1178
      %1361 = vmatmul.bf16.gmra.mxu0 %v1234
      %v1362 = vpop.f32.mrf.mxu0
      %v1363 = vadd.f32 %v1050, %v1362
      %v1364 = vpop.f32.mrf.mxu0
      %1365 = vdwg.mxu0
      %1366 = vmatpush.bf16.msra.mxu0 0
      %1367 = vmatpush.bf16.msra.mxu0 0
      %1368 = vmatpush.bf16.msra.mxu0 0
      %1369 = vmatpush.bf16.msra.mxu0 0
      %1370 = vmatpush.bf16.msra.mxu0 0
      %1371 = vmatpush.bf16.msra.mxu0 0
      %1372 = vmatpush.bf16.msra.mxu0 %v1195
      %1373 = vmatpush.bf16.msra.mxu0 %v1179
      %1374 = vmatmul.bf16.gmra.mxu0 %v1234
      %v1375 = vpop.f32.mrf.mxu0
      %v1376 = vadd.f32 %v1051, %v1375
      %v1377 = vpop.f32.mrf.mxu0
      %1378 = vdwg.mxu0
      %1379 = vmatpush.bf16.msra.mxu0 0
      %1380 = vmatpush.bf16.msra.mxu0 0
      %1381 = vmatpush.bf16.msra.mxu0 0
      %1382 = vmatpush.bf16.msra.mxu0 0
      %1383 = vmatpush.bf16.msra.mxu0 0
      %1384 = vmatpush.bf16.msra.mxu0 0
      %1385 = vmatpush.bf16.msra.mxu0 %v1196
      %1386 = vmatpush.bf16.msra.mxu0 %v1180
      %1387 = vmatmul.bf16.gmra.mxu0 %v1234
      %v1388 = vpop.f32.mrf.mxu0
      %v1389 = vadd.f32 %v1052, %v1388
      %v1390 = vpop.f32.mrf.mxu0
      %1391 = vdwg.mxu0
      %1392 = vmatpush.bf16.msra.mxu0 0
      %1393 = vmatpush.bf16.msra.mxu0 0
      %1394 = vmatpush.bf16.msra.mxu0 0
      %1395 = vmatpush.bf16.msra.mxu0 0
      %1396 = vmatpush.bf16.msra.mxu0 0
      %1397 = vmatpush.bf16.msra.mxu0 0
      %1398 = vmatpush.bf16.msra.mxu0 %v1197
      %1399 = vmatpush.bf16.msra.mxu0 %v1181
      %1400 = vmatmul.bf16.gmra.mxu0 %v1234
      %v1401 = vpop.f32.mrf.mxu0
      %v1402 = vadd.f32 %v1053, %v1401
      %v1403 = vpop.f32.mrf.mxu0
      %1404 = vdwg.mxu0
      %1405 = vmatpush.bf16.msra.mxu0 0
      %1406 = vmatpush.bf16.msra.mxu0 0
      %1407 = vmatpush.bf16.msra.mxu0 0
      %1408 = vmatpush.bf16.msra.mxu0 0
      %1409 = vmatpush.bf16.msra.mxu0 0
      %1410 = vmatpush.bf16.msra.mxu0 0
      %1411 = vmatpush.bf16.msra.mxu0 %v1198
      %1412 = vmatpush.bf16.msra.mxu0 %v1182
      %1413 = vmatmul.bf16.gmra.mxu0 %v1234
      %v1414 = vpop.f32.mrf.mxu0
      %v1415 = vadd.f32 %v1054, %v1414
      %v1416 = vpop.f32.mrf.mxu0
      %1417 = vdwg.mxu0
      %1418 = vmatpush.bf16.msra.mxu0 0
      %1419 = vmatpush.bf16.msra.mxu0 0
      %1420 = vmatpush.bf16.msra.mxu0 0
      %1421 = vmatpush.bf16.msra.mxu0 0
      %1422 = vmatpush.bf16.msra.mxu0 0
      %1423 = vmatpush.bf16.msra.mxu0 0
      %1424 = vmatpush.bf16.msra.mxu0 %v1199
      %1425 = vmatpush.bf16.msra.mxu0 %v1183
      %1426 = vmatmul.bf16.gmra.mxu0 %v1234
      %v1427 = vpop.f32.mrf.mxu0
      %v1428 = vadd.f32 %v1055, %v1427
      %v1429 = vpop.f32.mrf.mxu0
      %1430 = vdwg.mxu0
      %1431 = vmatpush.bf16.msra.mxu0 0
      %1432 = vmatpush.bf16.msra.mxu0 0
      %1433 = vmatpush.bf16.msra.mxu0 0
      %1434 = vmatpush.bf16.msra.mxu0 0
      %1435 = vmatpush.bf16.msra.mxu0 0
      %1436 = vmatpush.bf16.msra.mxu0 0
      %1437 = vmatpush.bf16.msra.mxu0 %v1200
      %1438 = vmatpush.bf16.msra.mxu0 %v1184
      %1439 = vmatmul.bf16.gmra.mxu0 %v1234
      %v1440 = vpop.f32.mrf.mxu0
      %v1441 = vadd.f32 %v1056, %v1440
      %v1442 = vpop.f32.mrf.mxu0
      %1443 = vdwg.mxu0
      %v1444 = vmax.f32 %v1246, 0.0
      %v1445 = vmax.f32 %v1259, 0.0
      %v1446 = vmax.f32 %v1272, 0.0
      %v1447 = vmax.f32 %v1285, 0.0
      %v1448 = vmax.f32 %v1298, 0.0
      %v1449 = vmax.f32 %v1311, 0.0
      %v1450 = vmax.f32 %v1324, 0.0
      %v1451 = vmax.f32 %v1337, 0.0
      %v1452 = vmax.f32 %v1350, 0.0
      %v1453 = vmax.f32 %v1363, 0.0
      %v1454 = vmax.f32 %v1376, 0.0
      %v1455 = vmax.f32 %v1389, 0.0
      %v1456 = vmax.f32 %v1402, 0.0
      %v1457 = vmax.f32 %v1415, 0.0
      %v1458 = vmax.f32 %v1428, 0.0
      %v1459 = vmax.f32 %v1441, 0.0
      %v1460 = vpack.c.bf16 %v1444, %v1444
      %v1461 = vpack.c.bf16 %v1445, %v1445
      %v1462 = vpack.c.bf16 %v1446, %v1446
      %v1463 = vpack.c.bf16 %v1447, %v1447
      %v1464 = vpack.c.bf16 %v1448, %v1448
      %v1465 = vpack.c.bf16 %v1449, %v1449
      %v1466 = vpack.c.bf16 %v1450, %v1450
      %v1467 = vpack.c.bf16 %v1451, %v1451
      %v1468 = vpack.c.bf16 %v1452, %v1452
      %v1469 = vpack.c.bf16 %v1453, %v1453
      %v1470 = vpack.c.bf16 %v1454, %v1454
      %v1471 = vpack.c.bf16 %v1455, %v1455
      %v1472 = vpack.c.bf16 %v1456, %v1456
      %v1473 = vpack.c.bf16 %v1457, %v1457
      %v1474 = vpack.c.bf16 %v1458, %v1458
      %v1475 = vpack.c.bf16 %v1459, %v1459
      %v1476 = vld [vmem:[%s686] sm:$0xff]
      %v1477 = vld [vmem:[%s686 + $0x8] sm:$0xff]
      %v1478 = vld [vmem:[%s686 + $0x10] sm:$0xff]
      %v1479 = vld [vmem:[%s686 + $0x18] sm:$0xff]
      %v1480 = vld [vmem:[%s686 + $0x20] sm:$0xff]
      %v1481 = vld [vmem:[%s686 + $0x28] sm:$0xff]
      %v1482 = vld [vmem:[%s686 + $0x30] sm:$0xff]
      %v1483 = vld [vmem:[%s686 + $0x38] sm:$0xff]
      %v1484 = vld [vmem:[%s686 + $0x40] sm:$0xff]
      %v1485 = vld [vmem:[%s686 + $0x48] sm:$0xff]
      %v1486 = vld [vmem:[%s686 + $0x50] sm:$0xff]
      %v1487 = vld [vmem:[%s686 + $0x58] sm:$0xff]
      %v1488 = vld [vmem:[%s686 + $0x60] sm:$0xff]
      %v1489 = vld [vmem:[%s686 + $0x68] sm:$0xff]
      %v1490 = vld [vmem:[%s686 + $0x70] sm:$0xff]
      %v1491 = vld [vmem:[%s686 + $0x78] sm:$0xff]
      %v1492 = vld [vmem:[%s686 + $0x80] sm:$0xff]
      %v1493 = vld [vmem:[%s686 + $0x88] sm:$0xff]
      %v1494 = vld [vmem:[%s686 + $0x90] sm:$0xff]
      %v1495 = vld [vmem:[%s686 + $0x98] sm:$0xff]
      %v1496 = vld [vmem:[%s686 + $0xa0] sm:$0xff]
      %v1497 = vld [vmem:[%s686 + $0xa8] sm:$0xff]
      %v1498 = vld [vmem:[%s686 + $0xb0] sm:$0xff]
      %v1499 = vld [vmem:[%s686 + $0xb8] sm:$0xff]
      %v1500 = vld [vmem:[%s686 + $0xc0] sm:$0xff]
      %v1501 = vld [vmem:[%s686 + $0xc8] sm:$0xff]
      %v1502 = vld [vmem:[%s686 + $0xd0] sm:$0xff]
      %v1503 = vld [vmem:[%s686 + $0xd8] sm:$0xff]
      %v1504 = vld [vmem:[%s686 + $0xe0] sm:$0xff]
      %v1505 = vld [vmem:[%s686 + $0xe8] sm:$0xff]
      %v1506 = vld [vmem:[%s686 + $0xf0] sm:$0xff]
      %v1507 = vld [vmem:[%s686 + $0xf8] sm:$0xff]
      %v1508 = vld [vmem:[%s689] sm:$0x1]
      %v1510 = vperm.slane %v1508, 0
      %v1544 = vunpack.c.l.b16 %v1476
      %v1545 = vunpack.c.h.b16 %v1476
      %v1546 = vunpack.c.l.b16 %v1477
      %v1547 = vunpack.c.h.b16 %v1477
      %v1548 = vunpack.c.l.b16 %v1478
      %v1549 = vunpack.c.h.b16 %v1478
      %v1550 = vunpack.c.l.b16 %v1479
      %v1551 = vunpack.c.h.b16 %v1479
      %v1552 = vunpack.c.l.b16 %v1480
      %v1553 = vunpack.c.h.b16 %v1480
      %v1554 = vunpack.c.l.b16 %v1481
      %v1555 = vunpack.c.h.b16 %v1481
      %v1556 = vunpack.c.l.b16 %v1482
      %v1557 = vunpack.c.h.b16 %v1482
      %v1558 = vunpack.c.l.b16 %v1483
      %v1559 = vunpack.c.h.b16 %v1483
      %v1560 = vunpack.c.l.b16 %v1484
      %v1561 = vunpack.c.h.b16 %v1484
      %v1562 = vunpack.c.l.b16 %v1485
      %v1563 = vunpack.c.h.b16 %v1485
      %v1564 = vunpack.c.l.b16 %v1486
      %v1565 = vunpack.c.h.b16 %v1486
      %v1566 = vunpack.c.l.b16 %v1487
      %v1567 = vunpack.c.h.b16 %v1487
      %v1568 = vunpack.c.l.b16 %v1488
      %v1569 = vunpack.c.h.b16 %v1488
      %v1570 = vunpack.c.l.b16 %v1489
      %v1571 = vunpack.c.h.b16 %v1489
      %v1572 = vunpack.c.l.b16 %v1490
      %v1573 = vunpack.c.h.b16 %v1490
      %v1574 = vunpack.c.l.b16 %v1491
      %v1575 = vunpack.c.h.b16 %v1491
      %v1576 = vunpack.c.l.b16 %v1492
      %v1577 = vunpack.c.h.b16 %v1492
      %v1578 = vunpack.c.l.b16 %v1493
      %v1579 = vunpack.c.h.b16 %v1493
      %v1580 = vunpack.c.l.b16 %v1494
      %v1581 = vunpack.c.h.b16 %v1494
      %v1582 = vunpack.c.l.b16 %v1495
      %v1583 = vunpack.c.h.b16 %v1495
      %v1584 = vunpack.c.l.b16 %v1496
      %v1585 = vunpack.c.h.b16 %v1496
      %v1586 = vunpack.c.l.b16 %v1497
      %v1587 = vunpack.c.h.b16 %v1497
      %v1588 = vunpack.c.l.b16 %v1498
      %v1589 = vunpack.c.h.b16 %v1498
      %v1590 = vunpack.c.l.b16 %v1499
      %v1591 = vunpack.c.h.b16 %v1499
      %v1592 = vunpack.c.l.b16 %v1500
      %v1593 = vunpack.c.h.b16 %v1500
      %v1594 = vunpack.c.l.b16 %v1501
      %v1595 = vunpack.c.h.b16 %v1501
      %v1596 = vunpack.c.l.b16 %v1502
      %v1597 = vunpack.c.h.b16 %v1502
      %v1598 = vunpack.c.l.b16 %v1503
      %v1599 = vunpack.c.h.b16 %v1503
      %v1600 = vunpack.c.l.b16 %v1504
      %v1601 = vunpack.c.h.b16 %v1504
      %v1602 = vunpack.c.l.b16 %v1505
      %v1603 = vunpack.c.h.b16 %v1505
      %v1604 = vunpack.c.l.b16 %v1506
      %v1605 = vunpack.c.h.b16 %v1506
      %v1606 = vunpack.c.l.b16 %v1507
      %v1607 = vunpack.c.h.b16 %v1507
      %v1608 = vpack.c.b16 %v1560, %v1544
      %v1609 = vpack.c.b16 %v1561, %v1545
      %v1610 = vpack.c.b16 %v1562, %v1546
      %v1611 = vpack.c.b16 %v1563, %v1547
      %v1612 = vpack.c.b16 %v1564, %v1548
      %v1613 = vpack.c.b16 %v1565, %v1549
      %v1614 = vpack.c.b16 %v1566, %v1550
      %v1615 = vpack.c.b16 %v1567, %v1551
      %v1616 = vpack.c.b16 %v1568, %v1552
      %v1617 = vpack.c.b16 %v1569, %v1553
      %v1618 = vpack.c.b16 %v1570, %v1554
      %v1619 = vpack.c.b16 %v1571, %v1555
      %v1620 = vpack.c.b16 %v1572, %v1556
      %v1621 = vpack.c.b16 %v1573, %v1557
      %v1622 = vpack.c.b16 %v1574, %v1558
      %v1623 = vpack.c.b16 %v1575, %v1559
      %v1624 = vpack.c.b16 %v1592, %v1576
      %v1625 = vpack.c.b16 %v1593, %v1577
      %v1626 = vpack.c.b16 %v1594, %v1578
      %v1627 = vpack.c.b16 %v1595, %v1579
      %v1628 = vpack.c.b16 %v1596, %v1580
      %v1629 = vpack.c.b16 %v1597, %v1581
      %v1630 = vpack.c.b16 %v1598, %v1582
      %v1631 = vpack.c.b16 %v1599, %v1583
      %v1632 = vpack.c.b16 %v1600, %v1584
      %v1633 = vpack.c.b16 %v1601, %v1585
      %v1634 = vpack.c.b16 %v1602, %v1586
      %v1635 = vpack.c.b16 %v1603, %v1587
      %v1636 = vpack.c.b16 %v1604, %v1588
      %v1637 = vpack.c.b16 %v1605, %v1589
      %v1638 = vpack.c.b16 %v1606, %v1590
      %v1639 = vpack.c.b16 %v1607, %v1591
      %1672 = vmatpush.bf16.xpose.msra.mxu0 0
      %1673 = vmatpush.bf16.xpose.msra.mxu0 0
      %1674 = vmatpush.bf16.xpose.msra.mxu0 0
      %1675 = vmatpush.bf16.xpose.msra.mxu0 0
      %1676 = vmatpush.bf16.xpose.msra.mxu0 0
      %1677 = vmatpush.bf16.xpose.msra.mxu0 0
      %1678 = vmatpush.bf16.xpose.msra.mxu0 %v1624
      %1679 = vmatpush.bf16.xpose.msra.mxu0 %v1608
      %1680 = vmatmul.bf16.gmra.mxu0 %v1460
      %v1681 = vpop.f32.mrf.mxu0
      %v1682 = vadd.f32 %v1510, %v1681
      %v1683 = vpop.f32.mrf.mxu0
      %1684 = vdwg.mxu0
      %1685 = vmatpush.bf16.xpose.msra.mxu0 0
      %1686 = vmatpush.bf16.xpose.msra.mxu0 0
      %1687 = vmatpush.bf16.xpose.msra.mxu0 0
      %1688 = vmatpush.bf16.xpose.msra.mxu0 0
      %1689 = vmatpush.bf16.xpose.msra.mxu0 0
      %1690 = vmatpush.bf16.xpose.msra.mxu0 0
      %1691 = vmatpush.bf16.xpose.msra.mxu0 %v1625
      %1692 = vmatpush.bf16.xpose.msra.mxu0 %v1609
      %1693 = vmatmul.bf16.gmra.mxu0 %v1461
      %v1694 = vpop.f32.mrf.mxu0
      %v1695 = vadd.f32 %v1682, %v1694
      %v1696 = vpop.f32.mrf.mxu0
      %1697 = vdwg.mxu0
      %1698 = vmatpush.bf16.xpose.msra.mxu0 0
      %1699 = vmatpush.bf16.xpose.msra.mxu0 0
      %1700 = vmatpush.bf16.xpose.msra.mxu0 0
      %1701 = vmatpush.bf16.xpose.msra.mxu0 0
      %1702 = vmatpush.bf16.xpose.msra.mxu0 0
      %1703 = vmatpush.bf16.xpose.msra.mxu0 0
      %1704 = vmatpush.bf16.xpose.msra.mxu0 %v1626
      %1705 = vmatpush.bf16.xpose.msra.mxu0 %v1610
      %1706 = vmatmul.bf16.gmra.mxu0 %v1462
      %v1707 = vpop.f32.mrf.mxu0
      %v1708 = vadd.f32 %v1695, %v1707
      %v1709 = vpop.f32.mrf.mxu0
      %1710 = vdwg.mxu0
      %1711 = vmatpush.bf16.xpose.msra.mxu0 0
      %1712 = vmatpush.bf16.xpose.msra.mxu0 0
      %1713 = vmatpush.bf16.xpose.msra.mxu0 0
      %1714 = vmatpush.bf16.xpose.msra.mxu0 0
      %1715 = vmatpush.bf16.xpose.msra.mxu0 0
      %1716 = vmatpush.bf16.xpose.msra.mxu0 0
      %1717 = vmatpush.bf16.xpose.msra.mxu0 %v1627
      %1718 = vmatpush.bf16.xpose.msra.mxu0 %v1611
      %1719 = vmatmul.bf16.gmra.mxu0 %v1463
      %v1720 = vpop.f32.mrf.mxu0
      %v1721 = vadd.f32 %v1708, %v1720
      %v1722 = vpop.f32.mrf.mxu0
      %1723 = vdwg.mxu0
      %1724 = vmatpush.bf16.xpose.msra.mxu0 0
      %1725 = vmatpush.bf16.xpose.msra.mxu0 0
      %1726 = vmatpush.bf16.xpose.msra.mxu0 0
      %1727 = vmatpush.bf16.xpose.msra.mxu0 0
      %1728 = vmatpush.bf16.xpose.msra.mxu0 0
      %1729 = vmatpush.bf16.xpose.msra.mxu0 0
      %1730 = vmatpush.bf16.xpose.msra.mxu0 %v1628
      %1731 = vmatpush.bf16.xpose.msra.mxu0 %v1612
      %1732 = vmatmul.bf16.gmra.mxu0 %v1464
      %v1733 = vpop.f32.mrf.mxu0
      %v1734 = vadd.f32 %v1721, %v1733
      %v1735 = vpop.f32.mrf.mxu0
      %1736 = vdwg.mxu0
      %1737 = vmatpush.bf16.xpose.msra.mxu0 0
      %1738 = vmatpush.bf16.xpose.msra.mxu0 0
      %1739 = vmatpush.bf16.xpose.msra.mxu0 0
      %1740 = vmatpush.bf16.xpose.msra.mxu0 0
      %1741 = vmatpush.bf16.xpose.msra.mxu0 0
      %1742 = vmatpush.bf16.xpose.msra.mxu0 0
      %1743 = vmatpush.bf16.xpose.msra.mxu0 %v1629
      %1744 = vmatpush.bf16.xpose.msra.mxu0 %v1613
      %1745 = vmatmul.bf16.gmra.mxu0 %v1465
      %v1746 = vpop.f32.mrf.mxu0
      %v1747 = vadd.f32 %v1734, %v1746
      %v1748 = vpop.f32.mrf.mxu0
      %1749 = vdwg.mxu0
      %1750 = vmatpush.bf16.xpose.msra.mxu0 0
      %1751 = vmatpush.bf16.xpose.msra.mxu0 0
      %1752 = vmatpush.bf16.xpose.msra.mxu0 0
      %1753 = vmatpush.bf16.xpose.msra.mxu0 0
      %1754 = vmatpush.bf16.xpose.msra.mxu0 0
      %1755 = vmatpush.bf16.xpose.msra.mxu0 0
      %1756 = vmatpush.bf16.xpose.msra.mxu0 %v1630
      %1757 = vmatpush.bf16.xpose.msra.mxu0 %v1614
      %1758 = vmatmul.bf16.gmra.mxu0 %v1466
      %v1759 = vpop.f32.mrf.mxu0
      %v1760 = vadd.f32 %v1747, %v1759
      %v1761 = vpop.f32.mrf.mxu0
      %1762 = vdwg.mxu0
      %1763 = vmatpush.bf16.xpose.msra.mxu0 0
      %1764 = vmatpush.bf16.xpose.msra.mxu0 0
      %1765 = vmatpush.bf16.xpose.msra.mxu0 0
      %1766 = vmatpush.bf16.xpose.msra.mxu0 0
      %1767 = vmatpush.bf16.xpose.msra.mxu0 0
      %1768 = vmatpush.bf16.xpose.msra.mxu0 0
      %1769 = vmatpush.bf16.xpose.msra.mxu0 %v1631
      %1770 = vmatpush.bf16.xpose.msra.mxu0 %v1615
      %1771 = vmatmul.bf16.gmra.mxu0 %v1467
      %v1772 = vpop.f32.mrf.mxu0
      %v1773 = vadd.f32 %v1760, %v1772
      %v1774 = vpop.f32.mrf.mxu0
      %1775 = vdwg.mxu0
      %1776 = vmatpush.bf16.xpose.msra.mxu0 0
      %1777 = vmatpush.bf16.xpose.msra.mxu0 0
      %1778 = vmatpush.bf16.xpose.msra.mxu0 0
      %1779 = vmatpush.bf16.xpose.msra.mxu0 0
      %1780 = vmatpush.bf16.xpose.msra.mxu0 0
      %1781 = vmatpush.bf16.xpose.msra.mxu0 0
      %1782 = vmatpush.bf16.xpose.msra.mxu0 %v1632
      %1783 = vmatpush.bf16.xpose.msra.mxu0 %v1616
      %1784 = vmatmul.bf16.gmra.mxu0 %v1468
      %v1785 = vpop.f32.mrf.mxu0
      %v1786 = vadd.f32 %v1773, %v1785
      %v1787 = vpop.f32.mrf.mxu0
      %1788 = vdwg.mxu0
      %1789 = vmatpush.bf16.xpose.msra.mxu0 0
      %1790 = vmatpush.bf16.xpose.msra.mxu0 0
      %1791 = vmatpush.bf16.xpose.msra.mxu0 0
      %1792 = vmatpush.bf16.xpose.msra.mxu0 0
      %1793 = vmatpush.bf16.xpose.msra.mxu0 0
      %1794 = vmatpush.bf16.xpose.msra.mxu0 0
      %1795 = vmatpush.bf16.xpose.msra.mxu0 %v1633
      %1796 = vmatpush.bf16.xpose.msra.mxu0 %v1617
      %1797 = vmatmul.bf16.gmra.mxu0 %v1469
      %v1798 = vpop.f32.mrf.mxu0
      %v1799 = vadd.f32 %v1786, %v1798
      %v1800 = vpop.f32.mrf.mxu0
      %1801 = vdwg.mxu0
      %1802 = vmatpush.bf16.xpose.msra.mxu0 0
      %1803 = vmatpush.bf16.xpose.msra.mxu0 0
      %1804 = vmatpush.bf16.xpose.msra.mxu0 0
      %1805 = vmatpush.bf16.xpose.msra.mxu0 0
      %1806 = vmatpush.bf16.xpose.msra.mxu0 0
      %1807 = vmatpush.bf16.xpose.msra.mxu0 0
      %1808 = vmatpush.bf16.xpose.msra.mxu0 %v1634
      %1809 = vmatpush.bf16.xpose.msra.mxu0 %v1618
      %1810 = vmatmul.bf16.gmra.mxu0 %v1470
      %v1811 = vpop.f32.mrf.mxu0
      %v1812 = vadd.f32 %v1799, %v1811
      %v1813 = vpop.f32.mrf.mxu0
      %1814 = vdwg.mxu0
      %1815 = vmatpush.bf16.xpose.msra.mxu0 0
      %1816 = vmatpush.bf16.xpose.msra.mxu0 0
      %1817 = vmatpush.bf16.xpose.msra.mxu0 0
      %1818 = vmatpush.bf16.xpose.msra.mxu0 0
      %1819 = vmatpush.bf16.xpose.msra.mxu0 0
      %1820 = vmatpush.bf16.xpose.msra.mxu0 0
      %1821 = vmatpush.bf16.xpose.msra.mxu0 %v1635
      %1822 = vmatpush.bf16.xpose.msra.mxu0 %v1619
      %1823 = vmatmul.bf16.gmra.mxu0 %v1471
      %v1824 = vpop.f32.mrf.mxu0
      %v1825 = vadd.f32 %v1812, %v1824
      %v1826 = vpop.f32.mrf.mxu0
      %1827 = vdwg.mxu0
      %1828 = vmatpush.bf16.xpose.msra.mxu0 0
      %1829 = vmatpush.bf16.xpose.msra.mxu0 0
      %1830 = vmatpush.bf16.xpose.msra.mxu0 0
      %1831 = vmatpush.bf16.xpose.msra.mxu0 0
      %1832 = vmatpush.bf16.xpose.msra.mxu0 0
      %1833 = vmatpush.bf16.xpose.msra.mxu0 0
      %1834 = vmatpush.bf16.xpose.msra.mxu0 %v1636
      %1835 = vmatpush.bf16.xpose.msra.mxu0 %v1620
      %1836 = vmatmul.bf16.gmra.mxu0 %v1472
      %v1837 = vpop.f32.mrf.mxu0
      %v1838 = vadd.f32 %v1825, %v1837
      %v1839 = vpop.f32.mrf.mxu0
      %1840 = vdwg.mxu0
      %1841 = vmatpush.bf16.xpose.msra.mxu0 0
      %1842 = vmatpush.bf16.xpose.msra.mxu0 0
      %1843 = vmatpush.bf16.xpose.msra.mxu0 0
      %1844 = vmatpush.bf16.xpose.msra.mxu0 0
      %1845 = vmatpush.bf16.xpose.msra.mxu0 0
      %1846 = vmatpush.bf16.xpose.msra.mxu0 0
      %1847 = vmatpush.bf16.xpose.msra.mxu0 %v1637
      %1848 = vmatpush.bf16.xpose.msra.mxu0 %v1621
      %1849 = vmatmul.bf16.gmra.mxu0 %v1473
      %v1850 = vpop.f32.mrf.mxu0
      %v1851 = vadd.f32 %v1838, %v1850
      %v1852 = vpop.f32.mrf.mxu0
      %1853 = vdwg.mxu0
      %1854 = vmatpush.bf16.xpose.msra.mxu0 0
      %1855 = vmatpush.bf16.xpose.msra.mxu0 0
      %1856 = vmatpush.bf16.xpose.msra.mxu0 0
      %1857 = vmatpush.bf16.xpose.msra.mxu0 0
      %1858 = vmatpush.bf16.xpose.msra.mxu0 0
      %1859 = vmatpush.bf16.xpose.msra.mxu0 0
      %1860 = vmatpush.bf16.xpose.msra.mxu0 %v1638
      %1861 = vmatpush.bf16.xpose.msra.mxu0 %v1622
      %1862 = vmatmul.bf16.gmra.mxu0 %v1474
      %v1863 = vpop.f32.mrf.mxu0
      %v1864 = vadd.f32 %v1851, %v1863
      %v1865 = vpop.f32.mrf.mxu0
      %1866 = vdwg.mxu0
      %1867 = vmatpush.bf16.xpose.msra.mxu0 0
      %1868 = vmatpush.bf16.xpose.msra.mxu0 0
      %1869 = vmatpush.bf16.xpose.msra.mxu0 0
      %1870 = vmatpush.bf16.xpose.msra.mxu0 0
      %1871 = vmatpush.bf16.xpose.msra.mxu0 0
      %1872 = vmatpush.bf16.xpose.msra.mxu0 0
      %1873 = vmatpush.bf16.xpose.msra.mxu0 %v1639
      %1874 = vmatpush.bf16.xpose.msra.mxu0 %v1623
      %1875 = vmatmul.bf16.gmra.mxu0 %v1475
      %v1876 = vpop.f32.mrf.mxu0
      %v1877 = vadd.f32 %v1864, %v1876
      %v1878 = vpop.f32.mrf.mxu0
      %1879 = vdwg.mxu0
      %v1880 = vadd.f32 %v971, %v1877
      %1881 = vst.msk [vmem:[#allocation2] sm:$0xff] %vm711, %v1880
      %s1882 = sld [smem:[#allocation5 + %s45]]
      %p1883 = scmp.eq.s32.totalorder %s1882, 1
      // Predicated region
      $region81: #{transformer_forward.1} parent=75 // pred_check
        %p1884 = pneg %p1883
      $region82: #{transformer_forward.1} parent=75 // pred_check_branch
        %1886 = sbr.rel (%p1884) target = $region84
      $region83: #{transformer_forward.1} parent=75 // pred_region
        %1887 = vst.msk [vmem:[%s698] sm:$0xff] %vm711, %v1880
      $region84: #{transformer_forward.1} parent=75 // pred_fallthru
        _
      %s1888 = sld [smem:[#allocation4 + %s45]]
      %p1889 = scmp.lt.s32.totalorder %s1888, 1
      %s1890 = scalar_select %p1889, %s1888, 1
      %p1891 = scmp.lt.s32.totalorder %s44, 1
      %s1892 = scalar_select %p1891, %s44, 1
      %s1893 = smul.addr %s1890, 2
      %s1894 = sadd.s32 %s1892, %s1893
      %s1895 = smul.addr %s1894, 8
      %s1896 = scalar_lea.vmem %s16, %s1895
      // Predicated region
      $region85: #{transformer_forward.1} parent=75 // pred_check
        %p1897 = pneg %p433
      $region86: #{transformer_forward.1} parent=75 // pred_check_branch
        %1899 = sbr.rel (%p1897) target = $region88
      $region87: #{transformer_forward.1} parent=75 // pred_region
        %s1900 = sld [smem:[#allocation4 + %s45]]
      $region88: #{transformer_forward.1} parent=75 // pred_fallthru
        _
    $region76: #{transformer_forward.1} parent=5 // pred_fallthru
      _
    %p1901 = scmp.le.s32.totalorder 2, %s35
    // Predicated region
    $region89: #{transformer_forward.1} parent=5 // pred_check
      %p1902 = pneg %p1901
    $region90: #{transformer_forward.1} parent=5 // pred_check_branch
      %1904 = sbr.rel (%p1902) target = $region92
    $region91: #{transformer_forward.1} parent=5 // pred_region
      %s1905 = ssub.s32 %s35, 2
      // Predicated region
      $region93: #{transformer_forward.1} parent=91 // pred_check
        %p1906 = pneg %p439
      $region94: #{transformer_forward.1} parent=91 // pred_check_branch
        %1908 = sbr.rel (%p1906) target = $region96
      $region95: #{transformer_forward.1} parent=91 // pred_region
        %s1909 = sld [smem:[#allocation4 + %s47]]
        %p1910 = scmp.lt.s32.totalorder %s1909, 1
        %s1911 = scalar_select %p1910, %s1909, 1
        %p1912 = scmp.lt.s32.totalorder %s46, 1
        %s1913 = scalar_select %p1912, %s46, 1
        %s1914 = smul.addr %s1911, 2
        %s1915 = sadd.s32 %s1913, %s1914
        %s1916 = smul.addr %s1915, 8
        %s1917 = scalar_lea.vmem %s16, %s1916
      $region96: #{transformer_forward.1} parent=91 // pred_fallthru
        _
    $region92: #{transformer_forward.1} parent=5 // pred_fallthru
      _
  $region6: #{transformer_forward.1} parent=0 // loop_footer
    %s39 = sadd.s32 1, %s35
  $region7: #{transformer_forward.1} parent=0 // loop_footer_branch
    %34 = sbr.rel target = $region3
  $region8: #{transformer_forward.1} parent=0 // loop_exit
    _

</llo_original>
